<compile_context>
chip_gen: v7x
topology: tpu7x:2x2x1
jax: 0.10.0
libtpu: 0.0.40
codegen_flags: <defaults>
</compile_context>

<pallas_src>
import functools

import jax
import jax.numpy as jnp
from jax import lax
from jax.experimental import pallas as pl
from jax.experimental.pallas import tpu as pltpu


def _resample_kernel(wmat_ref, cmask_ref, tril_ref, triu_ref, jj_ref, ii_ref,
                     x_ref, o_ref, *, H, W):
    # wmat_ref : (2, 9*C)  conv weight matrix, column order (ky, kx, c)
    # cmask_ref: (2, N)    lateral validity masks for dx = -1 / +1 conv taps
    # tril_ref : (H, H)    lower-triangular ones (cumsum over H)
    # triu_ref : (W, W)    upper-triangular ones (cumsum over W)
    # jj_ref   : (W, N)    jj[j, p] = j   (source column index plane)
    # ii_ref   : (H, N)    ii[i, p] = i   (source row index plane)
    # x_ref    : (1, C, N) one batch element, lane-dense (N = H*W)
    # o_ref    : (1, C, N) lane-dense output slab
    f32 = jnp.float32
    _, C, N = x_ref.shape

    xf = x_ref[0]                                                  # (C, N)

    # ---------- 3x3 conv (stride 1, zero pad 1, no bias) as one MXU matmul --
    # tap(dy,dx)[c, p] = x[c, i+dy, j+dx] (zeros outside).  In the flat layout
    # this is a shift by s = dy*W + dx with zero fill (covers row over/under-
    # flow) plus a lateral mask for the dx = +/-1 column wrap.
    def shifted(a, s):
        if s > 0:
            return jnp.concatenate([a[:, s:], jnp.zeros((C, s), f32)], axis=1)
        if s < 0:
            return jnp.concatenate([jnp.zeros((C, -s), f32), a[:, :N + s]], axis=1)
        return a

    taps = []
    for dy in (-1, 0, 1):
        for dx in (-1, 0, 1):
            t = shifted(xf, dy * W + dx)
            if dx == -1:
                t = t * cmask_ref[0:1, :]
            elif dx == 1:
                t = t * cmask_ref[1:2, :]
            taps.append(t)
    tap_mat = jnp.concatenate(taps, axis=0)                        # (9*C, N)
    g = jnp.dot(wmat_ref[...], tap_mat, preferred_element_type=f32)  # (2, N)

    # ---------- softmax over H (chan 0) / over W (chan 1), then 1 - softmax --
    def unflatten(row):                       # (1, N) -> (H, W) via slice+concat
        return jnp.concatenate([row[:, i * W:(i + 1) * W] for i in range(H)],
                               axis=0)

    g0 = unflatten(g[0:1, :])                                      # (H, W)
    g1 = unflatten(g[1:2, :])                                      # (H, W)
    e0 = jnp.exp(g0 - jnp.max(g0, axis=0, keepdims=True))
    a_y = 1.0 - e0 / jnp.sum(e0, axis=0, keepdims=True)            # (H, W)
    e1 = jnp.exp(g1 - jnp.max(g1, axis=1, keepdims=True))
    a_x = 1.0 - e1 / jnp.sum(e1, axis=1, keepdims=True)            # (H, W)

    # ---------- cumulative sums as triangular matmuls (MXU) ------------------
    # gy[i,:] = sum_{k<=i} a_y[k,:]  ;  gx[:,j] = sum_{k<=j} a_x[:,k]
    gy = jnp.dot(tril_ref[...], a_y, preferred_element_type=f32) * (2.0 / (H - 1)) - 1.0
    gx = jnp.dot(a_x, triu_ref[...], preferred_element_type=f32) * (2.0 / (W - 1)) - 1.0
    # NOTE: H==1 or W==1 divides by zero, exactly like the PyTorch formula.

    # ---------- grid_sample (bilinear, zeros padding, align_corners=False) ---
    # grid[...,0] = gy -> x/width coordinate ; grid[...,1] = gx -> y/height
    # coordinate.  The swap is intentional (module behaviour) -- do not "fix".
    ix = (gy + 1.0) * (W * 0.5) - 0.5                              # src col (H, W)
    iy = (gx + 1.0) * (H * 0.5) - 0.5                              # src row (H, W)

    def flatten(a):                           # (H, W) -> (1, N) via lane concat
        return jnp.concatenate([a[i:i + 1, :] for i in range(H)], axis=1)

    ixf = flatten(ix)                                              # (1, N)
    iyf = flatten(iy)                                              # (1, N)

    # Lane-dense bilinear "hat" weights: weight of source column j for output
    # pixel p is max(0, 1 - |j - ix[p]|)  (== wx0/wx1 one-hots combined, and 0
    # for out-of-range taps == zeros padding).  Same for rows.
    cwt = jnp.maximum(1.0 - jnp.abs(jj_ref[...] - ixf), 0.0)       # (W, N)
    rwt = jnp.maximum(1.0 - jnp.abs(ii_ref[...] - iyf), 0.0)       # (H, N)

    # Fold row + column interpolation into one (H*W_in, H*W_out) sampling
    # matrix and gather with a single MXU matmul.
    m = (rwt[:, None, :] * cwt[None, :, :]).reshape(H * W, N)      # (N_in, N_out)
    out = jnp.dot(xf, m, preferred_element_type=f32)               # (C, N)
    # TODO(synk): for large images (or v7x's 64 MiB VMEM) build `m` and the
    # gather matmul in output-column chunks and cast operands to bf16.

    o_ref[0] = out.astype(o_ref.dtype)                             # lane-dense store


def _resample_layer_impl(x, weight):
    """Pallas forward of ReSampleLayer.  x: (B,C,H,W), weight: (2,C,3,3)."""
    B, C, H, W = x.shape
    N = H * W
    xf = x.astype(jnp.float32).reshape(B, C, N)          # free metadata reshape

    # ---- grid-invariant constants (resident VMEM blocks, DMA'd once) -------
    # Conv weight as (2, 9*C) with column order (ky, kx, c), matching the
    # in-kernel tap stacking order (dy, dx, c).
    w_mat = jnp.transpose(weight.astype(jnp.float32), (0, 2, 3, 1)).reshape(2, 9 * C)
    col = jnp.arange(N, dtype=jnp.int32) % W
    cmask = jnp.stack([col != 0, col != W - 1]).astype(jnp.float32)        # (2, N)
    tril = (jnp.arange(H)[:, None] >= jnp.arange(H)[None, :]).astype(jnp.float32)
    triu = (jnp.arange(W)[:, None] <= jnp.arange(W)[None, :]).astype(jnp.float32)
    jj_c = jnp.broadcast_to(jnp.arange(W, dtype=jnp.float32)[:, None], (W, N))
    ii_c = jnp.broadcast_to(jnp.arange(H, dtype=jnp.float32)[:, None], (H, N))

    def const_spec(shape):
        return pl.BlockSpec(shape, lambda b: (0,) * len(shape))

    out_flat = pl.pallas_call(
        functools.partial(_resample_kernel, H=H, W=W),
        grid=(B,),
        in_specs=[
            const_spec((2, 9 * C)),                      # conv weight matrix
            const_spec((2, N)),                          # lateral conv masks
            const_spec((H, H)),                          # lower-tri (cumsum over H)
            const_spec((W, W)),                          # upper-tri (cumsum over W)
            const_spec((W, N)),                          # source-column index plane
            const_spec((H, N)),                          # source-row index plane
            pl.BlockSpec((1, C, N), lambda b: (b, 0, 0)),   # x, one batch element
        ],
        out_specs=pl.BlockSpec((1, C, N), lambda b: (b, 0, 0)),
        out_shape=jax.ShapeDtypeStruct((B, C, N), jnp.float32),
        compiler_params=pltpu.CompilerParams(
            dimension_semantics=("parallel",)),          # megacore-shard batch
    )(w_mat, cmask, tril, triu, jj_c, ii_c, xf)

    return out_flat.reshape(B, C, H, W)


resample_layer = jax.jit(_resample_layer_impl)


# ------------------------------ pure-JAX reference ---------------------------
def _grid_sample_ref(x, grid):
    B, C, H, W = x.shape
    xg = grid[..., 0]
    yg = grid[..., 1]
    ix = ((xg + 1.0) * W - 1.0) * 0.5
    iy = ((yg + 1.0) * H - 1.0) * 0.5
    ix0 = jnp.floor(ix)
    iy0 = jnp.floor(iy)
    ix1 = ix0 + 1.0
    iy1 = iy0 + 1.0
    wx1 = ix - ix0
    wx0 = 1.0 - wx1
    wy1 = iy - iy0
    wy0 = 1.0 - wy1
    xflat = x.reshape(B, C, H * W)

    def tap(iyc, ixc, wgt):
        valid = (ixc >= 0) & (ixc <= W - 1) & (iyc >= 0) & (iyc <= H - 1)
        iyc_c = jnp.clip(iyc, 0, H - 1).astype(jnp.int32)
        ixc_c = jnp.clip(ixc, 0, W - 1).astype(jnp.int32)
        idx = (iyc_c * W + ixc_c).reshape(B, 1, H * W)
        idx = jnp.broadcast_to(idx, (B, C, H * W))
        vals = jnp.take_along_axis(xflat, idx, axis=2).reshape(B, C, H, W)
        w = jnp.where(valid, wgt, 0.0)[:, None, :, :]
        return vals * w

    return (tap(iy0, ix0, wy0 * wx0) + tap(iy0, ix1, wy0 * wx1)
            + tap(iy1, ix0, wy1 * wx0) + tap(iy1, ix1, wy1 * wx1))


def resample_ref(x, weight):
    B, C, H, W = x.shape
    g = lax.conv_general_dilated(x, weight, window_strides=(1, 1),
                                 padding=((1, 1), (1, 1)),
                                 dimension_numbers=("NCHW", "OIHW", "NCHW"))
    gy = jax.nn.softmax(g[:, 0], axis=1)
    gx = jax.nn.softmax(g[:, 1], axis=2)
    gy = jnp.cumsum(1.0 - gy, axis=1) / (H - 1) * 2.0 - 1.0
    gx = jnp.cumsum(1.0 - gx, axis=2) / (W - 1) * 2.0 - 1.0
    grid = jnp.stack([gy, gx], axis=-1)                            # (B,H,W,2)
    return _grid_sample_ref(x, grid)


if __name__ == "__main__":
    B, C, H, W = 2, 4, 16, 16
    key = jax.random.PRNGKey(0)
    kx, kw = jax.random.split(key)
    x = jax.random.normal(kx, (B, C, H, W), dtype=jnp.float32)

    # (1) module-faithful weights: Conv2d(C, 2, 3, 1, 1, bias=False).weight.fill_(0.1)
    w_fill = jnp.full((2, C, 3, 3), 0.1, dtype=jnp.float32)
    # (2) random weights -- exercises the conv tap/weight ordering more strictly.
    w_rand = 0.1 * jax.random.normal(kw, (2, C, 3, 3), dtype=jnp.float32)

    for wgt in (w_fill, w_rand):
        out = jax.block_until_ready(resample_layer(x, wgt))
        assert out.shape == (B, C, H, W)
        ref = resample_ref(x, wgt)
        err = float(jnp.max(jnp.abs(out - ref)))
        assert err < 3e-2, f"max abs err {err}"

    print("KERNEL_OK")
</pallas_src>

<mosaic_0001>
module attributes {stable_mosaic.version = 11 : i64} {
  func.func @_resample_kernel(%arg0: i32, %arg1: memref<2x36xf32, #tpu.memory_space<vmem>>, %arg2: memref<2x256xf32, #tpu.memory_space<vmem>>, %arg3: memref<16x16xf32, #tpu.memory_space<vmem>>, %arg4: memref<16x16xf32, #tpu.memory_space<vmem>>, %arg5: memref<16x256xf32, #tpu.memory_space<vmem>>, %arg6: memref<16x256xf32, #tpu.memory_space<vmem>>, %arg7: memref<1x4x256xf32, #tpu.memory_space<vmem>>, %arg8: memref<1x4x256xf32, #tpu.memory_space<vmem>>) attributes {dimension_semantics = [#tpu.dimension_semantics<parallel>], iteration_bounds = array<i64: 2>, scalar_prefetch = 0 : i64, scratch_operands = 0 : i64, tpu.core_type = #tpu.core_type<tc>, window_params = [{pipeline_mode = #tpu.pipeline_mode<synchronous>, transform_indices = @transform_0, window_bounds = array<i64: 2, 36>}, {pipeline_mode = #tpu.pipeline_mode<synchronous>, transform_indices = @transform_1, window_bounds = array<i64: 2, 256>}, {pipeline_mode = #tpu.pipeline_mode<synchronous>, transform_indices = @transform_2, window_bounds = array<i64: 16, 16>}, {pipeline_mode = #tpu.pipeline_mode<synchronous>, transform_indices = @transform_3, window_bounds = array<i64: 16, 16>}, {pipeline_mode = #tpu.pipeline_mode<synchronous>, transform_indices = @transform_4, window_bounds = array<i64: 16, 256>}, {pipeline_mode = #tpu.pipeline_mode<synchronous>, transform_indices = @transform_5, window_bounds = array<i64: 16, 256>}, {transform_indices = @transform_6, window_bounds = array<i64: 1, 4, 256>}, {transform_indices = @transform_7, window_bounds = array<i64: 1, 4, 256>}]} {
    %c0 = arith.constant 0 : index
    %c0_0 = arith.constant 0 : index
    %c0_1 = arith.constant 0 : index
    %0 = vector.load %arg7[%c0, %c0_0, %c0_1] : memref<1x4x256xf32, #tpu.memory_space<vmem>>, vector<1x4x256xf32>
    %1 = vector.shape_cast %0 : vector<1x4x256xf32> to vector<4x256xf32>
    %cst = arith.constant 0.000000e+00 : f32
    %2 = vector.broadcast %cst : f32 to vector<4x17xf32>
    %3 = vector.extract_strided_slice %1 {offsets = [0, 0], sizes = [4, 239], strides = [1, 1]} : vector<4x256xf32> to vector<4x239xf32>
    %4 = tpu.concatenate %2, %3 in 1 : vector<4x17xf32>, vector<4x239xf32> -> vector<4x256xf32>
    %c0_2 = arith.constant 0 : index
    %c0_3 = arith.constant 0 : index
    %5 = vector.load %arg2[%c0_2, %c0_3] : memref<2x256xf32, #tpu.memory_space<vmem>>, vector<1x256xf32>
    %6 = vector.broadcast %5 : vector<1x256xf32> to vector<4x256xf32>
    %7 = arith.mulf %4, %6 : vector<4x256xf32>
    %cst_4 = arith.constant 0.000000e+00 : f32
    %8 = vector.broadcast %cst_4 : f32 to vector<4x16xf32>
    %9 = vector.extract_strided_slice %1 {offsets = [0, 0], sizes = [4, 240], strides = [1, 1]} : vector<4x256xf32> to vector<4x240xf32>
    %10 = tpu.concatenate %8, %9 in 1 : vector<4x16xf32>, vector<4x240xf32> -> vector<4x256xf32>
    %cst_5 = arith.constant 0.000000e+00 : f32
    %11 = vector.broadcast %cst_5 : f32 to vector<4x15xf32>
    %12 = vector.extract_strided_slice %1 {offsets = [0, 0], sizes = [4, 241], strides = [1, 1]} : vector<4x256xf32> to vector<4x241xf32>
    %13 = tpu.concatenate %11, %12 in 1 : vector<4x15xf32>, vector<4x241xf32> -> vector<4x256xf32>
    %c1 = arith.constant 1 : index
    %c0_6 = arith.constant 0 : index
    %14 = vector.load %arg2[%c1, %c0_6] : memref<2x256xf32, #tpu.memory_space<vmem>>, vector<1x256xf32>
    %15 = vector.broadcast %14 : vector<1x256xf32> to vector<4x256xf32>
    %16 = arith.mulf %13, %15 : vector<4x256xf32>
    %cst_7 = arith.constant 0.000000e+00 : f32
    %17 = vector.broadcast %cst_7 : f32 to vector<4x1xf32>
    %18 = vector.extract_strided_slice %1 {offsets = [0, 0], sizes = [4, 255], strides = [1, 1]} : vector<4x256xf32> to vector<4x255xf32>
    %19 = tpu.concatenate %17, %18 in 1 : vector<4x1xf32>, vector<4x255xf32> -> vector<4x256xf32>
    %c0_8 = arith.constant 0 : index
    %c0_9 = arith.constant 0 : index
    %20 = vector.load %arg2[%c0_8, %c0_9] : memref<2x256xf32, #tpu.memory_space<vmem>>, vector<1x256xf32>
    %21 = vector.broadcast %20 : vector<1x256xf32> to vector<4x256xf32>
    %22 = arith.mulf %19, %21 : vector<4x256xf32>
    %23 = vector.extract_strided_slice %1 {offsets = [0, 1], sizes = [4, 255], strides = [1, 1]} : vector<4x256xf32> to vector<4x255xf32>
    %cst_10 = arith.constant 0.000000e+00 : f32
    %24 = vector.broadcast %cst_10 : f32 to vector<4x1xf32>
    %25 = tpu.concatenate %23, %24 in 1 : vector<4x255xf32>, vector<4x1xf32> -> vector<4x256xf32>
    %c1_11 = arith.constant 1 : index
    %c0_12 = arith.constant 0 : index
    %26 = vector.load %arg2[%c1_11, %c0_12] : memref<2x256xf32, #tpu.memory_space<vmem>>, vector<1x256xf32>
    %27 = vector.broadcast %26 : vector<1x256xf32> to vector<4x256xf32>
    %28 = arith.mulf %25, %27 : vector<4x256xf32>
    %29 = vector.extract_strided_slice %1 {offsets = [0, 15], sizes = [4, 241], strides = [1, 1]} : vector<4x256xf32> to vector<4x241xf32>
    %cst_13 = arith.constant 0.000000e+00 : f32
    %30 = vector.broadcast %cst_13 : f32 to vector<4x15xf32>
    %31 = tpu.concatenate %29, %30 in 1 : vector<4x241xf32>, vector<4x15xf32> -> vector<4x256xf32>
    %c0_14 = arith.constant 0 : index
    %c0_15 = arith.constant 0 : index
    %32 = vector.load %arg2[%c0_14, %c0_15] : memref<2x256xf32, #tpu.memory_space<vmem>>, vector<1x256xf32>
    %33 = vector.broadcast %32 : vector<1x256xf32> to vector<4x256xf32>
    %34 = arith.mulf %31, %33 : vector<4x256xf32>
    %35 = vector.extract_strided_slice %1 {offsets = [0, 16], sizes = [4, 240], strides = [1, 1]} : vector<4x256xf32> to vector<4x240xf32>
    %cst_16 = arith.constant 0.000000e+00 : f32
    %36 = vector.broadcast %cst_16 : f32 to vector<4x16xf32>
    %37 = tpu.concatenate %35, %36 in 1 : vector<4x240xf32>, vector<4x16xf32> -> vector<4x256xf32>
    %38 = vector.extract_strided_slice %1 {offsets = [0, 17], sizes = [4, 239], strides = [1, 1]} : vector<4x256xf32> to vector<4x239xf32>
    %cst_17 = arith.constant 0.000000e+00 : f32
    %39 = vector.broadcast %cst_17 : f32 to vector<4x17xf32>
    %40 = tpu.concatenate %38, %39 in 1 : vector<4x239xf32>, vector<4x17xf32> -> vector<4x256xf32>
    %c1_18 = arith.constant 1 : index
    %c0_19 = arith.constant 0 : index
    %41 = vector.load %arg2[%c1_18, %c0_19] : memref<2x256xf32, #tpu.memory_space<vmem>>, vector<1x256xf32>
    %42 = vector.broadcast %41 : vector<1x256xf32> to vector<4x256xf32>
    %43 = arith.mulf %40, %42 : vector<4x256xf32>
    %44 = tpu.concatenate %7, %10, %16, %22, %1, %28, %34, %37, %43 in 0 : vector<4x256xf32>, vector<4x256xf32>, vector<4x256xf32>, vector<4x256xf32>, vector<4x256xf32>, vector<4x256xf32>, vector<4x256xf32>, vector<4x256xf32>, vector<4x256xf32> -> vector<36x256xf32>
    %c0_20 = arith.constant 0 : index
    %c0_21 = arith.constant 0 : index
    %45 = vector.load %arg1[%c0_20, %c0_21] : memref<2x36xf32, #tpu.memory_space<vmem>>, vector<2x36xf32>
    %cst_22 = arith.constant dense<0.000000e+00> : vector<2x256xf32>
    %46 = tpu.matmul %45, %44, %cst_22 {dimension_numbers = #tpu.dot_dimension_numbers<[1], [0], [0], [1], [0, 0, 1, 1], [], []>} : vector<2x36xf32>, vector<36x256xf32>, vector<2x256xf32> -> vector<2x256xf32>
    %47 = vector.extract_strided_slice %46 {offsets = [0, 0], sizes = [1, 256], strides = [1, 1]} : vector<2x256xf32> to vector<1x256xf32>
    %48 = vector.extract_strided_slice %47 {offsets = [0, 0], sizes = [1, 16], strides = [1, 1]} : vector<1x256xf32> to vector<1x16xf32>
    %49 = vector.extract_strided_slice %47 {offsets = [0, 16], sizes = [1, 16], strides = [1, 1]} : vector<1x256xf32> to vector<1x16xf32>
    %50 = vector.extract_strided_slice %47 {offsets = [0, 32], sizes = [1, 16], strides = [1, 1]} : vector<1x256xf32> to vector<1x16xf32>
    %51 = vector.extract_strided_slice %47 {offsets = [0, 48], sizes = [1, 16], strides = [1, 1]} : vector<1x256xf32> to vector<1x16xf32>
    %52 = vector.extract_strided_slice %47 {offsets = [0, 64], sizes = [1, 16], strides = [1, 1]} : vector<1x256xf32> to vector<1x16xf32>
    %53 = vector.extract_strided_slice %47 {offsets = [0, 80], sizes = [1, 16], strides = [1, 1]} : vector<1x256xf32> to vector<1x16xf32>
    %54 = vector.extract_strided_slice %47 {offsets = [0, 96], sizes = [1, 16], strides = [1, 1]} : vector<1x256xf32> to vector<1x16xf32>
    %55 = vector.extract_strided_slice %47 {offsets = [0, 112], sizes = [1, 16], strides = [1, 1]} : vector<1x256xf32> to vector<1x16xf32>
    %56 = vector.extract_strided_slice %47 {offsets = [0, 128], sizes = [1, 16], strides = [1, 1]} : vector<1x256xf32> to vector<1x16xf32>
    %57 = vector.extract_strided_slice %47 {offsets = [0, 144], sizes = [1, 16], strides = [1, 1]} : vector<1x256xf32> to vector<1x16xf32>
    %58 = vector.extract_strided_slice %47 {offsets = [0, 160], sizes = [1, 16], strides = [1, 1]} : vector<1x256xf32> to vector<1x16xf32>
    %59 = vector.extract_strided_slice %47 {offsets = [0, 176], sizes = [1, 16], strides = [1, 1]} : vector<1x256xf32> to vector<1x16xf32>
    %60 = vector.extract_strided_slice %47 {offsets = [0, 192], sizes = [1, 16], strides = [1, 1]} : vector<1x256xf32> to vector<1x16xf32>
    %61 = vector.extract_strided_slice %47 {offsets = [0, 208], sizes = [1, 16], strides = [1, 1]} : vector<1x256xf32> to vector<1x16xf32>
    %62 = vector.extract_strided_slice %47 {offsets = [0, 224], sizes = [1, 16], strides = [1, 1]} : vector<1x256xf32> to vector<1x16xf32>
    %63 = vector.extract_strided_slice %47 {offsets = [0, 240], sizes = [1, 16], strides = [1, 1]} : vector<1x256xf32> to vector<1x16xf32>
    %64 = tpu.concatenate %48, %49, %50, %51, %52, %53, %54, %55, %56, %57, %58, %59, %60, %61, %62, %63 in 0 : vector<1x16xf32>, vector<1x16xf32>, vector<1x16xf32>, vector<1x16xf32>, vector<1x16xf32>, vector<1x16xf32>, vector<1x16xf32>, vector<1x16xf32>, vector<1x16xf32>, vector<1x16xf32>, vector<1x16xf32>, vector<1x16xf32>, vector<1x16xf32>, vector<1x16xf32>, vector<1x16xf32>, vector<1x16xf32> -> vector<16x16xf32>
    %65 = vector.extract_strided_slice %46 {offsets = [1, 0], sizes = [1, 256], strides = [1, 1]} : vector<2x256xf32> to vector<1x256xf32>
    %66 = vector.extract_strided_slice %65 {offsets = [0, 0], sizes = [1, 16], strides = [1, 1]} : vector<1x256xf32> to vector<1x16xf32>
    %67 = vector.extract_strided_slice %65 {offsets = [0, 16], sizes = [1, 16], strides = [1, 1]} : vector<1x256xf32> to vector<1x16xf32>
    %68 = vector.extract_strided_slice %65 {offsets = [0, 32], sizes = [1, 16], strides = [1, 1]} : vector<1x256xf32> to vector<1x16xf32>
    %69 = vector.extract_strided_slice %65 {offsets = [0, 48], sizes = [1, 16], strides = [1, 1]} : vector<1x256xf32> to vector<1x16xf32>
    %70 = vector.extract_strided_slice %65 {offsets = [0, 64], sizes = [1, 16], strides = [1, 1]} : vector<1x256xf32> to vector<1x16xf32>
    %71 = vector.extract_strided_slice %65 {offsets = [0, 80], sizes = [1, 16], strides = [1, 1]} : vector<1x256xf32> to vector<1x16xf32>
    %72 = vector.extract_strided_slice %65 {offsets = [0, 96], sizes = [1, 16], strides = [1, 1]} : vector<1x256xf32> to vector<1x16xf32>
    %73 = vector.extract_strided_slice %65 {offsets = [0, 112], sizes = [1, 16], strides = [1, 1]} : vector<1x256xf32> to vector<1x16xf32>
    %74 = vector.extract_strided_slice %65 {offsets = [0, 128], sizes = [1, 16], strides = [1, 1]} : vector<1x256xf32> to vector<1x16xf32>
    %75 = vector.extract_strided_slice %65 {offsets = [0, 144], sizes = [1, 16], strides = [1, 1]} : vector<1x256xf32> to vector<1x16xf32>
    %76 = vector.extract_strided_slice %65 {offsets = [0, 160], sizes = [1, 16], strides = [1, 1]} : vector<1x256xf32> to vector<1x16xf32>
    %77 = vector.extract_strided_slice %65 {offsets = [0, 176], sizes = [1, 16], strides = [1, 1]} : vector<1x256xf32> to vector<1x16xf32>
    %78 = vector.extract_strided_slice %65 {offsets = [0, 192], sizes = [1, 16], strides = [1, 1]} : vector<1x256xf32> to vector<1x16xf32>
    %79 = vector.extract_strided_slice %65 {offsets = [0, 208], sizes = [1, 16], strides = [1, 1]} : vector<1x256xf32> to vector<1x16xf32>
    %80 = vector.extract_strided_slice %65 {offsets = [0, 224], sizes = [1, 16], strides = [1, 1]} : vector<1x256xf32> to vector<1x16xf32>
    %81 = vector.extract_strided_slice %65 {offsets = [0, 240], sizes = [1, 16], strides = [1, 1]} : vector<1x256xf32> to vector<1x16xf32>
    %82 = tpu.concatenate %66, %67, %68, %69, %70, %71, %72, %73, %74, %75, %76, %77, %78, %79, %80, %81 in 0 : vector<1x16xf32>, vector<1x16xf32>, vector<1x16xf32>, vector<1x16xf32>, vector<1x16xf32>, vector<1x16xf32>, vector<1x16xf32>, vector<1x16xf32>, vector<1x16xf32>, vector<1x16xf32>, vector<1x16xf32>, vector<1x16xf32>, vector<1x16xf32>, vector<1x16xf32>, vector<1x16xf32>, vector<1x16xf32> -> vector<16x16xf32>
    %cst_23 = arith.constant dense<0xFF800000> : vector<16xf32>
    %83 = vector.multi_reduction <maximumf>, %64, %cst_23 [0] : vector<16x16xf32> to vector<16xf32>
    %84 = vector.shape_cast %83 : vector<16xf32> to vector<1x16xf32>
    %85 = vector.broadcast %84 : vector<1x16xf32> to vector<16x16xf32>
    %86 = arith.subf %64, %85 : vector<16x16xf32>
    %87 = math.exp %86 : vector<16x16xf32>
    %cst_24 = arith.constant dense<0.000000e+00> : vector<16xf32>
    %88 = vector.multi_reduction <add>, %87, %cst_24 [0] : vector<16x16xf32> to vector<16xf32>
    %89 = vector.shape_cast %88 : vector<16xf32> to vector<1x16xf32>
    %90 = vector.broadcast %89 : vector<1x16xf32> to vector<16x16xf32>
    %91 = arith.divf %87, %90 : vector<16x16xf32>
    %cst_25 = arith.constant 1.000000e+00 : f32
    %92 = vector.broadcast %cst_25 : f32 to vector<16x16xf32>
    %93 = arith.subf %92, %91 : vector<16x16xf32>
    %cst_26 = arith.constant dense<0xFF800000> : vector<16xf32>
    %94 = vector.multi_reduction <maximumf>, %82, %cst_26 [1] : vector<16x16xf32> to vector<16xf32>
    %95 = vector.shape_cast %94 : vector<16xf32> to vector<16x1xf32>
    %96 = vector.broadcast %95 : vector<16x1xf32> to vector<16x16xf32>
    %97 = arith.subf %82, %96 : vector<16x16xf32>
    %98 = math.exp %97 : vector<16x16xf32>
    %cst_27 = arith.constant dense<0.000000e+00> : vector<16xf32>
    %99 = vector.multi_reduction <add>, %98, %cst_27 [1] : vector<16x16xf32> to vector<16xf32>
    %100 = vector.shape_cast %99 : vector<16xf32> to vector<16x1xf32>
    %101 = vector.broadcast %100 : vector<16x1xf32> to vector<16x16xf32>
    %102 = arith.divf %98, %101 : vector<16x16xf32>
    %cst_28 = arith.constant 1.000000e+00 : f32
    %103 = vector.broadcast %cst_28 : f32 to vector<16x16xf32>
    %104 = arith.subf %103, %102 : vector<16x16xf32>
    %c0_29 = arith.constant 0 : index
    %c0_30 = arith.constant 0 : index
    %105 = vector.load %arg3[%c0_29, %c0_30] : memref<16x16xf32, #tpu.memory_space<vmem>>, vector<16x16xf32>
    %cst_31 = arith.constant dense<0.000000e+00> : vector<16x16xf32>
    %106 = tpu.matmul %105, %93, %cst_31 {dimension_numbers = #tpu.dot_dimension_numbers<[1], [0], [0], [1], [0, 0, 1, 1], [], []>} : vector<16x16xf32>, vector<16x16xf32>, vector<16x16xf32> -> vector<16x16xf32>
    %cst_32 = arith.constant 0.13333334 : f32
    %107 = vector.broadcast %cst_32 : f32 to vector<16x16xf32>
    %108 = arith.mulf %106, %107 : vector<16x16xf32>
    %cst_33 = arith.constant 1.000000e+00 : f32
    %109 = vector.broadcast %cst_33 : f32 to vector<16x16xf32>
    %110 = arith.subf %108, %109 : vector<16x16xf32>
    %c0_34 = arith.constant 0 : index
    %c0_35 = arith.constant 0 : index
    %111 = vector.load %arg4[%c0_34, %c0_35] : memref<16x16xf32, #tpu.memory_space<vmem>>, vector<16x16xf32>
    %cst_36 = arith.constant dense<0.000000e+00> : vector<16x16xf32>
    %112 = tpu.matmul %104, %111, %cst_36 {dimension_numbers = #tpu.dot_dimension_numbers<[1], [0], [0], [1], [0, 0, 1, 1], [], []>} : vector<16x16xf32>, vector<16x16xf32>, vector<16x16xf32> -> vector<16x16xf32>
    %cst_37 = arith.constant 0.13333334 : f32
    %113 = vector.broadcast %cst_37 : f32 to vector<16x16xf32>
    %114 = arith.mulf %112, %113 : vector<16x16xf32>
    %cst_38 = arith.constant 1.000000e+00 : f32
    %115 = vector.broadcast %cst_38 : f32 to vector<16x16xf32>
    %116 = arith.subf %114, %115 : vector<16x16xf32>
    %cst_39 = arith.constant 1.000000e+00 : f32
    %117 = vector.broadcast %cst_39 : f32 to vector<16x16xf32>
    %118 = arith.addf %110, %117 : vector<16x16xf32>
    %cst_40 = arith.constant 8.000000e+00 : f32
    %119 = vector.broadcast %cst_40 : f32 to vector<16x16xf32>
    %120 = arith.mulf %118, %119 : vector<16x16xf32>
    %cst_41 = arith.constant 5.000000e-01 : f32
    %121 = vector.broadcast %cst_41 : f32 to vector<16x16xf32>
    %122 = arith.subf %120, %121 : vector<16x16xf32>
    %cst_42 = arith.constant 1.000000e+00 : f32
    %123 = vector.broadcast %cst_42 : f32 to vector<16x16xf32>
    %124 = arith.addf %116, %123 : vector<16x16xf32>
    %cst_43 = arith.constant 8.000000e+00 : f32
    %125 = vector.broadcast %cst_43 : f32 to vector<16x16xf32>
    %126 = arith.mulf %124, %125 : vector<16x16xf32>
    %cst_44 = arith.constant 5.000000e-01 : f32
    %127 = vector.broadcast %cst_44 : f32 to vector<16x16xf32>
    %128 = arith.subf %126, %127 : vector<16x16xf32>
    %129 = vector.extract_strided_slice %122 {offsets = [0, 0], sizes = [1, 16], strides = [1, 1]} : vector<16x16xf32> to vector<1x16xf32>
    %130 = vector.extract_strided_slice %122 {offsets = [1, 0], sizes = [1, 16], strides = [1, 1]} : vector<16x16xf32> to vector<1x16xf32>
    %131 = vector.extract_strided_slice %122 {offsets = [2, 0], sizes = [1, 16], strides = [1, 1]} : vector<16x16xf32> to vector<1x16xf32>
    %132 = vector.extract_strided_slice %122 {offsets = [3, 0], sizes = [1, 16], strides = [1, 1]} : vector<16x16xf32> to vector<1x16xf32>
    %133 = vector.extract_strided_slice %122 {offsets = [4, 0], sizes = [1, 16], strides = [1, 1]} : vector<16x16xf32> to vector<1x16xf32>
    %134 = vector.extract_strided_slice %122 {offsets = [5, 0], sizes = [1, 16], strides = [1, 1]} : vector<16x16xf32> to vector<1x16xf32>
    %135 = vector.extract_strided_slice %122 {offsets = [6, 0], sizes = [1, 16], strides = [1, 1]} : vector<16x16xf32> to vector<1x16xf32>
    %136 = vector.extract_strided_slice %122 {offsets = [7, 0], sizes = [1, 16], strides = [1, 1]} : vector<16x16xf32> to vector<1x16xf32>
    %137 = vector.extract_strided_slice %122 {offsets = [8, 0], sizes = [1, 16], strides = [1, 1]} : vector<16x16xf32> to vector<1x16xf32>
    %138 = vector.extract_strided_slice %122 {offsets = [9, 0], sizes = [1, 16], strides = [1, 1]} : vector<16x16xf32> to vector<1x16xf32>
    %139 = vector.extract_strided_slice %122 {offsets = [10, 0], sizes = [1, 16], strides = [1, 1]} : vector<16x16xf32> to vector<1x16xf32>
    %140 = vector.extract_strided_slice %122 {offsets = [11, 0], sizes = [1, 16], strides = [1, 1]} : vector<16x16xf32> to vector<1x16xf32>
    %141 = vector.extract_strided_slice %122 {offsets = [12, 0], sizes = [1, 16], strides = [1, 1]} : vector<16x16xf32> to vector<1x16xf32>
    %142 = vector.extract_strided_slice %122 {offsets = [13, 0], sizes = [1, 16], strides = [1, 1]} : vector<16x16xf32> to vector<1x16xf32>
    %143 = vector.extract_strided_slice %122 {offsets = [14, 0], sizes = [1, 16], strides = [1, 1]} : vector<16x16xf32> to vector<1x16xf32>
    %144 = vector.extract_strided_slice %122 {offsets = [15, 0], sizes = [1, 16], strides = [1, 1]} : vector<16x16xf32> to vector<1x16xf32>
    %145 = tpu.concatenate %129, %130, %131, %132, %133, %134, %135, %136, %137, %138, %139, %140, %141, %142, %143, %144 in 1 : vector<1x16xf32>, vector<1x16xf32>, vector<1x16xf32>, vector<1x16xf32>, vector<1x16xf32>, vector<1x16xf32>, vector<1x16xf32>, vector<1x16xf32>, vector<1x16xf32>, vector<1x16xf32>, vector<1x16xf32>, vector<1x16xf32>, vector<1x16xf32>, vector<1x16xf32>, vector<1x16xf32>, vector<1x16xf32> -> vector<1x256xf32>
    %146 = vector.extract_strided_slice %128 {offsets = [0, 0], sizes = [1, 16], strides = [1, 1]} : vector<16x16xf32> to vector<1x16xf32>
    %147 = vector.extract_strided_slice %128 {offsets = [1, 0], sizes = [1, 16], strides = [1, 1]} : vector<16x16xf32> to vector<1x16xf32>
    %148 = vector.extract_strided_slice %128 {offsets = [2, 0], sizes = [1, 16], strides = [1, 1]} : vector<16x16xf32> to vector<1x16xf32>
    %149 = vector.extract_strided_slice %128 {offsets = [3, 0], sizes = [1, 16], strides = [1, 1]} : vector<16x16xf32> to vector<1x16xf32>
    %150 = vector.extract_strided_slice %128 {offsets = [4, 0], sizes = [1, 16], strides = [1, 1]} : vector<16x16xf32> to vector<1x16xf32>
    %151 = vector.extract_strided_slice %128 {offsets = [5, 0], sizes = [1, 16], strides = [1, 1]} : vector<16x16xf32> to vector<1x16xf32>
    %152 = vector.extract_strided_slice %128 {offsets = [6, 0], sizes = [1, 16], strides = [1, 1]} : vector<16x16xf32> to vector<1x16xf32>
    %153 = vector.extract_strided_slice %128 {offsets = [7, 0], sizes = [1, 16], strides = [1, 1]} : vector<16x16xf32> to vector<1x16xf32>
    %154 = vector.extract_strided_slice %128 {offsets = [8, 0], sizes = [1, 16], strides = [1, 1]} : vector<16x16xf32> to vector<1x16xf32>
    %155 = vector.extract_strided_slice %128 {offsets = [9, 0], sizes = [1, 16], strides = [1, 1]} : vector<16x16xf32> to vector<1x16xf32>
    %156 = vector.extract_strided_slice %128 {offsets = [10, 0], sizes = [1, 16], strides = [1, 1]} : vector<16x16xf32> to vector<1x16xf32>
    %157 = vector.extract_strided_slice %128 {offsets = [11, 0], sizes = [1, 16], strides = [1, 1]} : vector<16x16xf32> to vector<1x16xf32>
    %158 = vector.extract_strided_slice %128 {offsets = [12, 0], sizes = [1, 16], strides = [1, 1]} : vector<16x16xf32> to vector<1x16xf32>
    %159 = vector.extract_strided_slice %128 {offsets = [13, 0], sizes = [1, 16], strides = [1, 1]} : vector<16x16xf32> to vector<1x16xf32>
    %160 = vector.extract_strided_slice %128 {offsets = [14, 0], sizes = [1, 16], strides = [1, 1]} : vector<16x16xf32> to vector<1x16xf32>
    %161 = vector.extract_strided_slice %128 {offsets = [15, 0], sizes = [1, 16], strides = [1, 1]} : vector<16x16xf32> to vector<1x16xf32>
    %162 = tpu.concatenate %146, %147, %148, %149, %150, %151, %152, %153, %154, %155, %156, %157, %158, %159, %160, %161 in 1 : vector<1x16xf32>, vector<1x16xf32>, vector<1x16xf32>, vector<1x16xf32>, vector<1x16xf32>, vector<1x16xf32>, vector<1x16xf32>, vector<1x16xf32>, vector<1x16xf32>, vector<1x16xf32>, vector<1x16xf32>, vector<1x16xf32>, vector<1x16xf32>, vector<1x16xf32>, vector<1x16xf32>, vector<1x16xf32> -> vector<1x256xf32>
    %c0_45 = arith.constant 0 : index
    %c0_46 = arith.constant 0 : index
    %163 = vector.load %arg5[%c0_45, %c0_46] : memref<16x256xf32, #tpu.memory_space<vmem>>, vector<16x256xf32>
    %164 = vector.broadcast %145 : vector<1x256xf32> to vector<16x256xf32>
    %165 = arith.subf %163, %164 : vector<16x256xf32>
    %166 = math.absf %165 : vector<16x256xf32>
    %cst_47 = arith.constant 1.000000e+00 : f32
    %167 = vector.broadcast %cst_47 : f32 to vector<16x256xf32>
    %168 = arith.subf %167, %166 : vector<16x256xf32>
    %cst_48 = arith.constant 0.000000e+00 : f32
    %169 = vector.broadcast %cst_48 : f32 to vector<16x256xf32>
    %170 = arith.maximumf %168, %169 : vector<16x256xf32>
    %c0_49 = arith.constant 0 : index
    %c0_50 = arith.constant 0 : index
    %171 = vector.load %arg6[%c0_49, %c0_50] : memref<16x256xf32, #tpu.memory_space<vmem>>, vector<16x256xf32>
    %172 = vector.broadcast %162 : vector<1x256xf32> to vector<16x256xf32>
    %173 = arith.subf %171, %172 : vector<16x256xf32>
    %174 = math.absf %173 : vector<16x256xf32>
    %cst_51 = arith.constant 1.000000e+00 : f32
    %175 = vector.broadcast %cst_51 : f32 to vector<16x256xf32>
    %176 = arith.subf %175, %174 : vector<16x256xf32>
    %cst_52 = arith.constant 0.000000e+00 : f32
    %177 = vector.broadcast %cst_52 : f32 to vector<16x256xf32>
    %178 = arith.maximumf %176, %177 : vector<16x256xf32>
    %179 = vector.shape_cast %178 : vector<16x256xf32> to vector<16x1x256xf32>
    %180 = vector.shape_cast %170 : vector<16x256xf32> to vector<1x16x256xf32>
    %181 = vector.broadcast %179 : vector<16x1x256xf32> to vector<16x16x256xf32>
    %182 = vector.broadcast %180 : vector<1x16x256xf32> to vector<16x16x256xf32>
    %183 = arith.mulf %181, %182 : vector<16x16x256xf32>
    %184 = vector.shape_cast %183 : vector<16x16x256xf32> to vector<256x256xf32>
    %cst_53 = arith.constant dense<0.000000e+00> : vector<4x256xf32>
    %185 = tpu.matmul %1, %184, %cst_53 {dimension_numbers = #tpu.dot_dimension_numbers<[1], [0], [0], [1], [0, 0, 1, 1], [], []>} : vector<4x256xf32>, vector<256x256xf32>, vector<4x256xf32> -> vector<4x256xf32>
    %c0_54 = arith.constant 0 : index
    %c0_55 = arith.constant 0 : index
    %c0_56 = arith.constant 0 : index
    %186 = vector.load %arg8[%c0_54, %c0_55, %c0_56] : memref<1x4x256xf32, #tpu.memory_space<vmem>>, vector<1x4x256xf32>
    %187 = vector.shape_cast %186 : vector<1x4x256xf32> to vector<4x256xf32>
    %188 = vector.shape_cast %185 : vector<4x256xf32> to vector<1x4x256xf32>
    tpu.vector_store %arg8[%c0_54, %c0_55, %c0_56], %188 {strides = array<i32>} : memref<1x4x256xf32, #tpu.memory_space<vmem>>, vector<1x4x256xf32>,
    return
  }
  func.func @transform_0(%arg0: i32) -> (i32, i32) {
    %c0_i32 = arith.constant 0 : i32
    %c0_i32_0 = arith.constant 0 : i32
    %c0_i32_1 = arith.constant 0 : i32
    return %c0_i32, %c0_i32_0 : i32, i32
  }
  func.func @transform_1(%arg0: i32) -> (i32, i32) {
    %c0_i32 = arith.constant 0 : i32
    %c0_i32_0 = arith.constant 0 : i32
    %c0_i32_1 = arith.constant 0 : i32
    return %c0_i32, %c0_i32_0 : i32, i32
  }
  func.func @transform_2(%arg0: i32) -> (i32, i32) {
    %c0_i32 = arith.constant 0 : i32
    %c0_i32_0 = arith.constant 0 : i32
    %c0_i32_1 = arith.constant 0 : i32
    return %c0_i32, %c0_i32_0 : i32, i32
  }
  func.func @transform_3(%arg0: i32) -> (i32, i32) {
    %c0_i32 = arith.constant 0 : i32
    %c0_i32_0 = arith.constant 0 : i32
    %c0_i32_1 = arith.constant 0 : i32
    return %c0_i32, %c0_i32_0 : i32, i32
  }
  func.func @transform_4(%arg0: i32) -> (i32, i32) {
    %c0_i32 = arith.constant 0 : i32
    %c0_i32_0 = arith.constant 0 : i32
    %c0_i32_1 = arith.constant 0 : i32
    return %c0_i32, %c0_i32_0 : i32, i32
  }
  func.func @transform_5(%arg0: i32) -> (i32, i32) {
    %c0_i32 = arith.constant 0 : i32
    %c0_i32_0 = arith.constant 0 : i32
    %c0_i32_1 = arith.constant 0 : i32
    return %c0_i32, %c0_i32_0 : i32, i32
  }
  func.func @transform_6(%arg0: i32) -> (i32, i32, i32) {
    %c0_i32 = arith.constant 0 : i32
    %c0_i32_0 = arith.constant 0 : i32
    %c0_i32_1 = arith.constant 0 : i32
    return %arg0, %c0_i32, %c0_i32_0 : i32, i32, i32
  }
  func.func @transform_7(%arg0: i32) -> (i32, i32, i32) {
    %c0_i32 = arith.constant 0 : i32
    %c0_i32_0 = arith.constant 0 : i32
    %c0_i32_1 = arith.constant 0 : i32
    return %arg0, %c0_i32, %c0_i32_0 : i32, i32, i32
  }
}

</mosaic_0001>

<llo_original>
// kernel: _resample_layer_impl.1
$region0: #{_resample_layer_impl.1}
  #allocation0 [shape = 'u32[]', space=smem, size = 0x4, offset = 0x4, fixed_abs, tag = 'smem constant byte address 0x4 - core index']
  #allocation1 [shape = 'u32[144,128]{1,0:T(1,128)}', space=vmem, size = 0x12000, scoped, tag = 'internal scratch']
  %s0 = inlined_call_operand.vmem [shape: f32[2,36], index: 0, kind: input, shape index: {}]
  %s1 = inlined_call_operand.vmem [shape: f32[2,256], index: 1, kind: input, shape index: {}]
  %s2 = inlined_call_operand.vmem [shape: f32[16,16], index: 2, kind: input, shape index: {}]
  %s3 = inlined_call_operand.vmem [shape: f32[16,16], index: 3, kind: input, shape index: {}]
  %s4 = inlined_call_operand.vmem [shape: f32[16,256], index: 4, kind: input, shape index: {}, may-alias: {4,5}]
  %s5 = inlined_call_operand.vmem [shape: f32[16,256], index: 5, kind: input, shape index: {}, may-alias: {4,5}]
  %s6 = inlined_call_operand.vmem [shape: f32[2,4,256], index: 6, kind: input, shape index: {}]
  %s7 = inlined_call_operand.vmem [shape: f32[2,4,256], index: 7, kind: output, shape index: {}]
  %s8 = sld [smem:[#allocation0]]
  $region61: #{_resample_layer_impl.1} parent=0
    _
  %s10 = ssub.s32 1, %s8
  %s11 = scalar_select 0, %s10, %s8
  loop: start=0, step=1, limit=4
  $region2: #{_resample_layer_impl.1} parent=0 // loop_pre_header
    _
  $region3: #{_resample_layer_impl.1} parent=0 // loop_header
    %s13 = sphi 0, %s17
    %p14 = scmp.ge.s32.totalorder %s13, 4
    %s21 = sphi 0, %s21
    %s23 = sphi 0, %s21
    %s24 = sphi 0, %s23
    %s38 = sphi 0, %s24
    %s42 = sphi 0, %s42
    %s44 = sphi 0, %s42
    %s45 = sphi 0, %s44
    %s59 = sphi 0, %s45
    %s63 = sphi 0, %s63
    %s65 = sphi 0, %s63
    %s66 = sphi 0, %s65
    %s80 = sphi 0, %s66
    %s84 = sphi 0, %s84
    %s86 = sphi 0, %s84
    %s87 = sphi 0, %s86
    %s101 = sphi 0, %s87
    %s105 = sphi 0, %s105
    %s107 = sphi 0, %s105
    %s108 = sphi 0, %s107
    %s122 = sphi 0, %s108
    %s126 = sphi 0, %s126
    %s128 = sphi 0, %s126
    %s129 = sphi 0, %s128
    %s143 = sphi 0, %s129
    %s149 = sphi 0, %s151
    %s152 = sphi 0, %s149
    %s153 = sphi 0, %s152
    %s169 = sphi 0, %s153
    %s175 = sphi 0, %s177
    %s178 = sphi 0, %s175
    %s179 = sphi 0, %s178
    %s195 = sphi 0, %s179
  $region4: #{_resample_layer_impl.1} parent=0 // loop_header_branch
    %16 = sbr.rel (%p14) target = $region8
  $region5: #{_resample_layer_impl.1} parent=0 // loop_body
    %s18 = ssub.s32 %s13, 1
    %s19 = ssub.s32 %s13, 2
    %s20 = sadd.s32 %s13, 1
    %s22 = sadd.s32 %s21, 1
    %p25 = scmp.eq.s32.totalorder %s13, 1
    %p26 = scmp.ne.s32.totalorder %s21, %s23
    %p27 = scmp.eq.s32.totalorder %s13, 0
    %p28 = por %p26, %p27
    %p29 = scmp.ne.s32.totalorder %s21, %s23
    %p30 = scmp.eq.s32.totalorder %s18, 1
    %p31 = por %p29, %p30
    %p32 = scmp.ne.s32.totalorder %s23, %s24
    %p33 = scmp.eq.s32.totalorder %s18, 0
    %p34 = por %p32, %p33
    %p35 = scmp.ne.s32.totalorder %s23, %s24
    %p36 = scmp.eq.s32.totalorder %s19, 1
    %p37 = por %p35, %p36
    %p39 = scmp.ne.s32.totalorder %s24, %s38
    %p40 = scmp.eq.s32.totalorder %s19, 0
    %p41 = por %p39, %p40
    %s43 = sadd.s32 %s42, 1
    %p46 = scmp.eq.s32.totalorder %s13, 1
    %p47 = scmp.ne.s32.totalorder %s42, %s44
    %p48 = scmp.eq.s32.totalorder %s13, 0
    %p49 = por %p47, %p48
    %p50 = scmp.ne.s32.totalorder %s42, %s44
    %p51 = scmp.eq.s32.totalorder %s18, 1
    %p52 = por %p50, %p51
    %p53 = scmp.ne.s32.totalorder %s44, %s45
    %p54 = scmp.eq.s32.totalorder %s18, 0
    %p55 = por %p53, %p54
    %p56 = scmp.ne.s32.totalorder %s44, %s45
    %p57 = scmp.eq.s32.totalorder %s19, 1
    %p58 = por %p56, %p57
    %p60 = scmp.ne.s32.totalorder %s45, %s59
    %p61 = scmp.eq.s32.totalorder %s19, 0
    %p62 = por %p60, %p61
    %s64 = sadd.s32 %s63, 1
    %p67 = scmp.eq.s32.totalorder %s13, 1
    %p68 = scmp.ne.s32.totalorder %s63, %s65
    %p69 = scmp.eq.s32.totalorder %s13, 0
    %p70 = por %p68, %p69
    %p71 = scmp.ne.s32.totalorder %s63, %s65
    %p72 = scmp.eq.s32.totalorder %s18, 1
    %p73 = por %p71, %p72
    %p74 = scmp.ne.s32.totalorder %s65, %s66
    %p75 = scmp.eq.s32.totalorder %s18, 0
    %p76 = por %p74, %p75
    %p77 = scmp.ne.s32.totalorder %s65, %s66
    %p78 = scmp.eq.s32.totalorder %s19, 1
    %p79 = por %p77, %p78
    %p81 = scmp.ne.s32.totalorder %s66, %s80
    %p82 = scmp.eq.s32.totalorder %s19, 0
    %p83 = por %p81, %p82
    %s85 = sadd.s32 %s84, 1
    %p88 = scmp.eq.s32.totalorder %s13, 1
    %p89 = scmp.ne.s32.totalorder %s84, %s86
    %p90 = scmp.eq.s32.totalorder %s13, 0
    %p91 = por %p89, %p90
    %p92 = scmp.ne.s32.totalorder %s84, %s86
    %p93 = scmp.eq.s32.totalorder %s18, 1
    %p94 = por %p92, %p93
    %p95 = scmp.ne.s32.totalorder %s86, %s87
    %p96 = scmp.eq.s32.totalorder %s18, 0
    %p97 = por %p95, %p96
    %p98 = scmp.ne.s32.totalorder %s86, %s87
    %p99 = scmp.eq.s32.totalorder %s19, 1
    %p100 = por %p98, %p99
    %p102 = scmp.ne.s32.totalorder %s87, %s101
    %p103 = scmp.eq.s32.totalorder %s19, 0
    %p104 = por %p102, %p103
    %s106 = sadd.s32 %s105, 1
    %p109 = scmp.eq.s32.totalorder %s13, 1
    %p110 = scmp.ne.s32.totalorder %s105, %s107
    %p111 = scmp.eq.s32.totalorder %s13, 0
    %p112 = por %p110, %p111
    %p113 = scmp.ne.s32.totalorder %s105, %s107
    %p114 = scmp.eq.s32.totalorder %s18, 1
    %p115 = por %p113, %p114
    %p116 = scmp.ne.s32.totalorder %s107, %s108
    %p117 = scmp.eq.s32.totalorder %s18, 0
    %p118 = por %p116, %p117
    %p119 = scmp.ne.s32.totalorder %s107, %s108
    %p120 = scmp.eq.s32.totalorder %s19, 1
    %p121 = por %p119, %p120
    %p123 = scmp.ne.s32.totalorder %s108, %s122
    %p124 = scmp.eq.s32.totalorder %s19, 0
    %p125 = por %p123, %p124
    %s127 = sadd.s32 %s126, 1
    %p130 = scmp.eq.s32.totalorder %s13, 1
    %p131 = scmp.ne.s32.totalorder %s126, %s128
    %p132 = scmp.eq.s32.totalorder %s13, 0
    %p133 = por %p131, %p132
    %p134 = scmp.ne.s32.totalorder %s126, %s128
    %p135 = scmp.eq.s32.totalorder %s18, 1
    %p136 = por %p134, %p135
    %p137 = scmp.ne.s32.totalorder %s128, %s129
    %p138 = scmp.eq.s32.totalorder %s18, 0
    %p139 = por %p137, %p138
    %p140 = scmp.ne.s32.totalorder %s128, %s129
    %p141 = scmp.eq.s32.totalorder %s19, 1
    %p142 = por %p140, %p141
    %p144 = scmp.ne.s32.totalorder %s129, %s143
    %p145 = scmp.eq.s32.totalorder %s19, 0
    %p146 = por %p144, %p145
    %s147 = ssub.s32 %s13, %s20
    %p148 = scmp.eq.s32.totalorder %s147, 0
    %s150 = sadd.s32 %s149, 1
    %s151 = scalar_select %p148, %s149, %s150
    %p154 = pneg %p148
    %p155 = scmp.eq.s32.totalorder %s13, 1
    %p156 = por %p154, %p155
    %p157 = scmp.ne.s32.totalorder %s149, %s152
    %p158 = scmp.eq.s32.totalorder %s13, 0
    %p159 = por %p157, %p158
    %p160 = scmp.ne.s32.totalorder %s149, %s152
    %p161 = scmp.eq.s32.totalorder %s18, 1
    %p162 = por %p160, %p161
    %p163 = scmp.ne.s32.totalorder %s152, %s153
    %p164 = scmp.eq.s32.totalorder %s18, 0
    %p165 = por %p163, %p164
    %p166 = scmp.ne.s32.totalorder %s152, %s153
    %p167 = scmp.eq.s32.totalorder %s19, 1
    %p168 = por %p166, %p167
    %p170 = scmp.ne.s32.totalorder %s153, %s169
    %p171 = scmp.eq.s32.totalorder %s19, 0
    %p172 = por %p170, %p171
    %s173 = ssub.s32 %s13, %s20
    %p174 = scmp.eq.s32.totalorder %s173, 0
    %s176 = sadd.s32 %s175, 1
    %s177 = scalar_select %p174, %s175, %s176
    %p180 = pneg %p174
    %p181 = scmp.eq.s32.totalorder %s13, 1
    %p182 = por %p180, %p181
    %p183 = scmp.ne.s32.totalorder %s175, %s178
    %p184 = scmp.eq.s32.totalorder %s13, 0
    %p185 = por %p183, %p184
    %p186 = scmp.ne.s32.totalorder %s175, %s178
    %p187 = scmp.eq.s32.totalorder %s18, 1
    %p188 = por %p186, %p187
    %p189 = scmp.ne.s32.totalorder %s178, %s179
    %p190 = scmp.eq.s32.totalorder %s18, 0
    %p191 = por %p189, %p190
    %p192 = scmp.ne.s32.totalorder %s178, %s179
    %p193 = scmp.eq.s32.totalorder %s19, 1
    %p194 = por %p192, %p193
    %p196 = scmp.ne.s32.totalorder %s179, %s195
    %p197 = scmp.eq.s32.totalorder %s19, 0
    %p198 = por %p196, %p197
    %p199 = scmp.le.s32.totalorder 1, %s13
    %p200 = scmp.lt.s32.totalorder %s13, 3
    %p201 = pnand %p199, %p200
    %p202 = pneg %p201
    // Predicated region
    $region9: #{_resample_layer_impl.1} parent=5 // pred_check
      _
    $region10: #{_resample_layer_impl.1} parent=5 // pred_check_branch
      %204 = sbr.rel (%p201) target = $region12
    $region11: #{_resample_layer_impl.1} parent=5 // pred_region
      %s205 = ssub.s32 %s13, 1
      // Predicated region
      $region13: #{_resample_layer_impl.1} parent=11 // pred_check
        %p206 = pneg %p34
      $region14: #{_resample_layer_impl.1} parent=11 // pred_check_branch
        %208 = sbr.rel (%p206) target = $region16
      $region15: #{_resample_layer_impl.1} parent=11 // pred_region
        _
      $region16: #{_resample_layer_impl.1} parent=11 // pred_fallthru
        _
      // Predicated region
      $region17: #{_resample_layer_impl.1} parent=11 // pred_check
        %p209 = pneg %p55
      $region18: #{_resample_layer_impl.1} parent=11 // pred_check_branch
        %211 = sbr.rel (%p209) target = $region20
      $region19: #{_resample_layer_impl.1} parent=11 // pred_region
        _
      $region20: #{_resample_layer_impl.1} parent=11 // pred_fallthru
        _
      // Predicated region
      $region21: #{_resample_layer_impl.1} parent=11 // pred_check
        %p212 = pneg %p76
      $region22: #{_resample_layer_impl.1} parent=11 // pred_check_branch
        %214 = sbr.rel (%p212) target = $region24
      $region23: #{_resample_layer_impl.1} parent=11 // pred_region
        _
      $region24: #{_resample_layer_impl.1} parent=11 // pred_fallthru
        _
      // Predicated region
      $region25: #{_resample_layer_impl.1} parent=11 // pred_check
        %p215 = pneg %p97
      $region26: #{_resample_layer_impl.1} parent=11 // pred_check_branch
        %217 = sbr.rel (%p215) target = $region28
      $region27: #{_resample_layer_impl.1} parent=11 // pred_region
        _
      $region28: #{_resample_layer_impl.1} parent=11 // pred_fallthru
        _
      // Predicated region
      $region29: #{_resample_layer_impl.1} parent=11 // pred_check
        %p218 = pneg %p118
      $region30: #{_resample_layer_impl.1} parent=11 // pred_check_branch
        %220 = sbr.rel (%p218) target = $region32
      $region31: #{_resample_layer_impl.1} parent=11 // pred_region
        _
      $region32: #{_resample_layer_impl.1} parent=11 // pred_fallthru
        _
      // Predicated region
      $region33: #{_resample_layer_impl.1} parent=11 // pred_check
        %p221 = pneg %p139
      $region34: #{_resample_layer_impl.1} parent=11 // pred_check_branch
        %223 = sbr.rel (%p221) target = $region36
      $region35: #{_resample_layer_impl.1} parent=11 // pred_region
        _
      $region36: #{_resample_layer_impl.1} parent=11 // pred_fallthru
        _
    $region12: #{_resample_layer_impl.1} parent=5 // pred_fallthru
      _
    %p224 = scmp.lt.s32.totalorder %s13, 2
    // Predicated region
    $region37: #{_resample_layer_impl.1} parent=5 // pred_check
      %p225 = pneg %p224
    $region38: #{_resample_layer_impl.1} parent=5 // pred_check_branch
      %227 = sbr.rel (%p225) target = $region40
    $region39: #{_resample_layer_impl.1} parent=5 // pred_region
      // Predicated region
      $region41: #{_resample_layer_impl.1} parent=39 // pred_check
        %p228 = pneg %p159
      $region42: #{_resample_layer_impl.1} parent=39 // pred_check_branch
        %230 = sbr.rel (%p228) target = $region44
      $region43: #{_resample_layer_impl.1} parent=39 // pred_region
        %p231 = scmp.lt.s32.totalorder %s13, 1
        %s232 = scalar_select %p231, %s13, 1
        %s233 = smul.addr %s232, 2
        %s234 = smul.addr %s233, 4
        %s235 = scalar_lea.vmem %s6, %s234
      $region44: #{_resample_layer_impl.1} parent=39 // pred_fallthru
        _
    $region40: #{_resample_layer_impl.1} parent=5 // pred_fallthru
      _
    %p236 = scmp.le.s32.totalorder 1, %s13
    %p237 = scmp.lt.s32.totalorder %s13, 3
    %p238 = pnand %p236, %p237
    %p239 = pneg %p238
    // Predicated region
    $region45: #{_resample_layer_impl.1} parent=5 // pred_check
      _
    $region46: #{_resample_layer_impl.1} parent=5 // pred_check_branch
      %241 = sbr.rel (%p238) target = $region48
    $region47: #{_resample_layer_impl.1} parent=5 // pred_region
      %s242 = ssub.s32 %s13, 1
      %p243 = pneg %p34
      %p244 = pneg %p31
      %p245 = pneg %p55
      %p246 = pneg %p52
      %p247 = pneg %p76
      %p248 = pneg %p73
      %p249 = pneg %p97
      %p250 = pneg %p94
      %p251 = pneg %p118
      %p252 = pneg %p115
      %p253 = pneg %p139
      %p254 = pneg %p136
      %p255 = scmp.lt.s32.totalorder %s18, 1
      %s256 = scalar_select %p255, %s18, 1
      %s257 = smul.addr %s256, 2
      %s258 = smul.addr %s257, 4
      %s259 = scalar_lea.vmem %s6, %s258
      %p260 = pneg %p165
      %p261 = pneg %p162
      %p262 = pneg %p191
      %p263 = pneg %p188
      %p264 = scmp.lt.s32.totalorder %s18, 1
      %s265 = scalar_select %p264, %s18, 1
      %s266 = smul.addr %s265, 2
      %s267 = smul.addr %s266, 4
      %s268 = scalar_lea.vmem %s7, %s267
      %p269 = scmp.lt.s32.totalorder %s18, 1
      %s270 = scalar_select %p269, %s18, 1
      %s271 = smul.addr %s270, 2
      %s272 = smul.addr %s271, 4
      %s273 = scalar_lea.vmem %s6, %s272
      %p274 = scmp.lt.s32.totalorder %s18, 1
      %s275 = scalar_select %p274, %s18, 1
      %s276 = smul.addr %s275, 2
      %s277 = smul.addr %s276, 4
      %s278 = scalar_lea.vmem %s7, %s277
      %v279 = vld [vmem:[%s273] sm:$0xff]
      %v281 = vcombine.high %v279, %v279
      %282 = vrot.lane.b32.xlu0 %v279, 17
      %v283 = vpop.permute.xlu0 %282
      %284 = vrot.lane.b32.xlu0 %v281, 17
      %v285 = vpop.permute.xlu0 %284
      %vm286 = vcmask 138240
      %v287 = vsel %vm286, %v283, %v285
      %v290 = vsel %vm286, 0.0, %v283
      %v291 = vld [vmem:[%s1] ss:$2 sm:$0x3]
      %v293 = vlaneseq
      %v294 = vshrl.u32 %v293, 7
      %v295 = vsub.s32 0, %v294
      %v296 = vrot.slane %v291, %v295
      %v297 = vlaneseq
      %v298 = vshrl.u32 %v297, 7
      %v299 = vsub.s32 1, %v298
      %v300 = vrot.slane %v291, %v299
      %v303 = vmul.f32 %v290, %v296
      %v304 = vmul.f32 %v287, %v300
      %305 = vrot.lane.b32.xlu0 %v279, 16
      %v306 = vpop.permute.xlu0 %305
      %307 = vrot.lane.b32.xlu0 %v281, 16
      %v308 = vpop.permute.xlu0 %307
      %vm309 = vcmask 130048
      %v310 = vsel %vm309, %v306, %v308
      %v312 = vsel %vm309, 0.0, %v306
      %313 = vrot.lane.b32.xlu0 %v279, 15
      %v314 = vpop.permute.xlu0 %313
      %315 = vrot.lane.b32.xlu0 %v281, 15
      %v316 = vpop.permute.xlu0 %315
      %vm317 = vcmask 121856
      %v318 = vsel %vm317, %v314, %v316
      %v321 = vsel %vm317, 0.0, %v314
      %s322 = scalar_lea.vmem %s1, 1
      %v323 = vld [vmem:[%s322] ss:$2 sm:$0x3]
      %v325 = vlaneseq
      %v326 = vshrl.u32 %v325, 7
      %v327 = vsub.s32 0, %v326
      %v328 = vrot.slane %v323, %v327
      %v329 = vlaneseq
      %v330 = vshrl.u32 %v329, 7
      %v331 = vsub.s32 1, %v330
      %v332 = vrot.slane %v323, %v331
      %v335 = vmul.f32 %v321, %v328
      %v336 = vmul.f32 %v318, %v332
      %337 = vrot.lane.b32.xlu0 %v279, 1
      %v338 = vpop.permute.xlu0 %337
      %339 = vrot.lane.b32.xlu0 %v281, 1
      %v340 = vpop.permute.xlu0 %339
      %vm341 = vcmask 7168
      %v342 = vsel %vm341, %v338, %v340
      %v345 = vsel %vm341, 0.0, %v338
      %v346 = vmul.f32 %v345, %v296
      %v347 = vmul.f32 %v342, %v300
      %348 = vrot.lane.b32.xlu0 %v279, 127
      %v349 = vpop.permute.xlu0 %348
      %350 = vrot.lane.b32.xlu0 %v281, 127
      %v351 = vpop.permute.xlu0 %350
      %vm352 = vcmask 1039360
      %v353 = vsel %vm352, %v349, %v351
      %v356 = vsel %vm352, %v351, 0.0
      %v357 = vmul.f32 %v353, %v328
      %v358 = vmul.f32 %v356, %v332
      %359 = vrot.lane.b32.xlu0 %v279, 113
      %v360 = vpop.permute.xlu0 %359
      %361 = vrot.lane.b32.xlu0 %v281, 113
      %v362 = vpop.permute.xlu0 %361
      %vm363 = vcmask 924672
      %v364 = vsel %vm363, %v360, %v362
      %v367 = vsel %vm363, %v362, 0.0
      %v368 = vmul.f32 %v364, %v296
      %v369 = vmul.f32 %v367, %v300
      %370 = vrot.lane.b32.xlu0 %v279, 112
      %v371 = vpop.permute.xlu0 %370
      %372 = vrot.lane.b32.xlu0 %v281, 112
      %v373 = vpop.permute.xlu0 %372
      %vm374 = vcmask 916480
      %v375 = vsel %vm374, %v371, %v373
      %v377 = vsel %vm374, %v373, 0.0
      %378 = vrot.lane.b32.xlu0 %v279, 111
      %v379 = vpop.permute.xlu0 %378
      %380 = vrot.lane.b32.xlu0 %v281, 111
      %v381 = vpop.permute.xlu0 %380
      %vm382 = vcmask 908288
      %v383 = vsel %vm382, %v379, %v381
      %v386 = vsel %vm382, %v381, 0.0
      %v387 = vmul.f32 %v383, %v328
      %v388 = vmul.f32 %v386, %v332
      %v390 = vrot.slane %v312, 4
      %v391 = vrot.slane %v310, 4
      %v396 = vrot.slane %v346, 4
      %v397 = vrot.slane %v347, 4
      %v403 = vrot.slane %v357, 4
      %v404 = vrot.slane %v358, 4
      %v408 = vrot.slane %v375, 4
      %v409 = vrot.slane %v377, 4
      %vm412 = vcmask 1043456
      %v413 = vsel %vm412, %v303, %v390
      %v414 = vsel %vm412, %v304, %v391
      %v415 = vsel %vm412, %v335, %v396
      %v416 = vsel %vm412, %v336, %v397
      %v417 = vsel %vm412, %v279, %v403
      %v418 = vsel %vm412, %v281, %v404
      %v419 = vsel %vm412, %v368, %v408
      %v420 = vsel %vm412, %v369, %v409
      %v421 = vld [vmem:[%s0] sm:$0x3]
      %vm422 = vcmask 293888
      %v424 = vsel %vm422, %v421, 0
      %v427 = vsel %vm412, %v387, 0
      %v430 = vsel %vm412, %v388, 0
      %432 = vmatprep.subr.mxu0 %v414
      %433 = vmatpush1.msra.mxu0 %v413
      %434 = vmatprep.subr.mxu0 %v416
      %435 = vmatpush1.msra.mxu0 %v415
      %436 = vmatprep.subr.mxu0 %v418
      %437 = vmatpush1.msra.mxu0 %v417
      %438 = vmatprep.subr.mxu0 %v420
      %439 = vmatpush1.msra.mxu0 %v419
      %440 = vmatprep.subr.mxu0 %v430
      %441 = vmatpush1.msra.mxu0 %v427
      %442 = vmatprep.subr.mxu0 0.0
      %443 = vmatpush1.msra.mxu0 0.0
      %444 = vmatprep.subr.mxu0 0.0
      %445 = vmatpush1.msra.mxu0 0.0
      %446 = vmatprep.subr.mxu0 0.0
      %447 = vmatpush1.msra.mxu0 0.0
      %448 = vmatprep.subr.mxu0 0.0
      %449 = vmatpush1.msra.mxu0 0.0
      %450 = vmatprep.subr.mxu0 0.0
      %451 = vmatpush1.msra.mxu0 0.0
      %452 = vmatprep.subr.mxu0 0.0
      %453 = vmatpush1.msra.mxu0 0.0
      %454 = vmatprep.subr.mxu0 0.0
      %455 = vmatpush1.msra.mxu0 0.0
      %456 = vmatprep.subr.mxu0 0.0
      %457 = vmatpush1.msra.mxu0 0.0
      %458 = vmatprep.subr.mxu0 0.0
      %459 = vmatpush1.msra.mxu0 0.0
      %460 = vmatprep.subr.mxu0 0.0
      %461 = vmatpush1.msra.mxu0 0.0
      %462 = vmatprep.subr.mxu0 0.0
      %463 = vmatpush1.msra.mxu0 0.0
      %464 = vmatprep.subr.mxu0 0.0
      %465 = vmatpush1.msra.mxu0 0.0
      %466 = vmatprep.subr.mxu0 0.0
      %467 = vmatpush1.msra.mxu0 0.0
      %468 = vmatprep.subr.mxu0 0.0
      %469 = vmatpush1.msra.mxu0 0.0
      %470 = vmatprep.subr.mxu0 0.0
      %471 = vmatpush1.msra.mxu0 0.0
      %472 = vmatprep.subr.mxu0 0.0
      %473 = vmatpush1.msra.mxu0 0.0
      %474 = vmatprep.subr.mxu0 0.0
      %475 = vmatpush1.msra.mxu0 0.0
      %476 = vmatprep.subr.mxu0 0.0
      %477 = vmatpush1.msra.mxu0 0.0
      %478 = vmatprep.subr.mxu0 0.0
      %479 = vmatpush1.msra.mxu0 0.0
      %480 = vmatprep.subr.mxu0 0.0
      %481 = vmatpush1.msra.mxu0 0.0
      %482 = vmatprep.subr.mxu0 0.0
      %483 = vmatpush1.msra.mxu0 0.0
      %484 = vmatprep.subr.mxu0 0.0
      %485 = vmatpush1.msra.mxu0 0.0
      %486 = vmatprep.subr.mxu0 0.0
      %487 = vmatpush1.msra.mxu0 0.0
      %488 = vmatprep.subr.mxu0 0.0
      %489 = vmatpush1.msra.mxu0 0.0
      %490 = vmatprep.subr.mxu0 0.0
      %491 = vmatpush1.msra.mxu0 0.0
      %492 = vmatprep.subr.mxu0 0.0
      %493 = vmatpush1.msra.mxu0 0.0
      %494 = vmatprep.subr.mxu0 0.0
      %495 = vmatpush1.msra.mxu0 0.0
      %496 = vmatprep.mubr.f32.mxu0 0.0
      %497 = vmatmul.mubr.f32.gmra.mrb[0].mxu0 %v424
      %v498 = vpop.f32.mrb[0].mxu0
      %v499 = vadd.f32 0.0, %v498
      %v500 = vpop.f32.mrb[0].mxu0
      %v501 = vadd.f32 0.0, %v500
      %502 = vdwg.mxu0
      %v504 = vrot.slane %v499, 7
      %505 = vrot.lane.b32.xlu0 %v504, 112
      %v506 = vpop.permute.xlu0 %505
      %v508 = vrot.slane %v499, 6
      %509 = vrot.lane.b32.xlu0 %v508, 96
      %v510 = vpop.permute.xlu0 %509
      %v512 = vrot.slane %v499, 5
      %513 = vrot.lane.b32.xlu0 %v512, 80
      %v514 = vpop.permute.xlu0 %513
      %v516 = vrot.slane %v499, 4
      %517 = vrot.lane.b32.xlu0 %v516, 64
      %v518 = vpop.permute.xlu0 %517
      %v520 = vrot.slane %v499, 3
      %521 = vrot.lane.b32.xlu0 %v520, 48
      %v522 = vpop.permute.xlu0 %521
      %v524 = vrot.slane %v499, 2
      %525 = vrot.lane.b32.xlu0 %v524, 32
      %v526 = vpop.permute.xlu0 %525
      %v528 = vrot.slane %v499, 1
      %529 = vrot.lane.b32.xlu0 %v528, 16
      %v530 = vpop.permute.xlu0 %529
      %v533 = vrot.slane %v501, 7
      %534 = vrot.lane.b32.xlu0 %v533, 112
      %v535 = vpop.permute.xlu0 %534
      %v537 = vrot.slane %v501, 6
      %538 = vrot.lane.b32.xlu0 %v537, 96
      %v539 = vpop.permute.xlu0 %538
      %v541 = vrot.slane %v501, 5
      %542 = vrot.lane.b32.xlu0 %v541, 80
      %v543 = vpop.permute.xlu0 %542
      %v545 = vrot.slane %v501, 4
      %546 = vrot.lane.b32.xlu0 %v545, 64
      %v547 = vpop.permute.xlu0 %546
      %v549 = vrot.slane %v501, 3
      %550 = vrot.lane.b32.xlu0 %v549, 48
      %v551 = vpop.permute.xlu0 %550
      %v553 = vrot.slane %v501, 2
      %554 = vrot.lane.b32.xlu0 %v553, 32
      %v555 = vpop.permute.xlu0 %554
      %v557 = vrot.slane %v501, 1
      %558 = vrot.lane.b32.xlu0 %v557, 16
      %v559 = vpop.permute.xlu0 %558
      %vm561 = vcmask 1040384
      %v562 = vsel %vm561, %v499, %v506
      %vm563 = vcmask 1041408
      %v564 = vsel %vm563, %v562, %v510
      %vm565 = vcmask 1042432
      %v566 = vsel %vm565, %v564, %v514
      %v567 = vsel %vm412, %v566, %v518
      %vm568 = vcmask 1044480
      %v569 = vsel %vm568, %v567, %v522
      %vm570 = vcmask 1045504
      %v571 = vsel %vm570, %v569, %v526
      %vm572 = vcmask 1046528
      %v573 = vsel %vm572, %v571, %v530
      %v574 = vsel %vm561, %v501, %v535
      %v575 = vsel %vm563, %v574, %v539
      %v576 = vsel %vm565, %v575, %v543
      %v577 = vsel %vm412, %v576, %v547
      %v578 = vsel %vm568, %v577, %v551
      %v579 = vsel %vm570, %v578, %v555
      %v580 = vsel %vm572, %v579, %v559
      %582 = vrot.lane.b32.xlu0 %v499, 112
      %v583 = vpop.permute.xlu0 %582
      %585 = vrot.lane.b32.xlu0 %v504, 96
      %v586 = vpop.permute.xlu0 %585
      %588 = vrot.lane.b32.xlu0 %v508, 80
      %v589 = vpop.permute.xlu0 %588
      %591 = vrot.lane.b32.xlu0 %v512, 64
      %v592 = vpop.permute.xlu0 %591
      %594 = vrot.lane.b32.xlu0 %v516, 48
      %v595 = vpop.permute.xlu0 %594
      %597 = vrot.lane.b32.xlu0 %v520, 32
      %v598 = vpop.permute.xlu0 %597
      %600 = vrot.lane.b32.xlu0 %v524, 16
      %v601 = vpop.permute.xlu0 %600
      %604 = vrot.lane.b32.xlu0 %v501, 112
      %v605 = vpop.permute.xlu0 %604
      %607 = vrot.lane.b32.xlu0 %v533, 96
      %v608 = vpop.permute.xlu0 %607
      %610 = vrot.lane.b32.xlu0 %v537, 80
      %v611 = vpop.permute.xlu0 %610
      %613 = vrot.lane.b32.xlu0 %v541, 64
      %v614 = vpop.permute.xlu0 %613
      %616 = vrot.lane.b32.xlu0 %v545, 48
      %v617 = vpop.permute.xlu0 %616
      %619 = vrot.lane.b32.xlu0 %v549, 32
      %v620 = vpop.permute.xlu0 %619
      %622 = vrot.lane.b32.xlu0 %v553, 16
      %v623 = vpop.permute.xlu0 %622
      %v625 = vsel %vm561, %v528, %v583
      %v626 = vsel %vm563, %v625, %v586
      %v627 = vsel %vm565, %v626, %v589
      %v628 = vsel %vm412, %v627, %v592
      %v629 = vsel %vm568, %v628, %v595
      %v630 = vsel %vm570, %v629, %v598
      %v631 = vsel %vm572, %v630, %v601
      %v632 = vsel %vm561, %v557, %v605
      %v633 = vsel %vm563, %v632, %v608
      %v634 = vsel %vm565, %v633, %v611
      %v635 = vsel %vm412, %v634, %v614
      %v636 = vsel %vm568, %v635, %v617
      %v637 = vsel %vm570, %v636, %v620
      %v638 = vsel %vm572, %v637, %v623
      %v639 = vsel %vm309, %v573, -inf
      %v640 = vsel %vm309, %v580, -inf
      %v641 = vmax.f32 %v639, %v640
      %v642 = vrot.slane %v641, 4
      %v643 = vmax.f32 %v641, %v642
      %v644 = vrot.slane %v643, 2
      %v645 = vmax.f32 %v643, %v644
      %v646 = vrot.slane %v645, 1
      %v647 = vmax.f32 %v645, %v646
      %v648 = vsub.f32 %v573, %v647
      %v649 = vsub.f32 %v580, %v647
      %v650 = vmul.f32 %v648, 1.442695
      %v651 = vpow.pop %v650
      %v652 = vmul.f32 %v649, 1.442695
      %v653 = vpow.pop %v652
      %v654 = vsel %vm309, %v651, 0.0
      %v655 = vsel %vm309, %v653, 0.0
      %v656 = vadd.f32 %v654, %v655
      %v657 = vrot.slane %v656, 4
      %v658 = vadd.f32 %v656, %v657
      %v659 = vrot.slane %v658, 2
      %v660 = vadd.f32 %v658, %v659
      %v661 = vrot.slane %v660, 1
      %v662 = vadd.f32 %v660, %v661
      %v663 = vrcp.pop %v662
      %v664 = vmul.f32 %v651, %v663
      %v665 = vmul.f32 %v653, %v663
      %v666 = vsub.f32 1.0, %v664
      %v667 = vsub.f32 1.0, %v665
      %v668 = vsel %vm309, %v631, -inf
      %669 = vmax.xlane.f32.xlu0 %v668
      %v670 = vpop.xlane.xlu0 %669
      %v671 = vsel %vm309, %v638, -inf
      %672 = vmax.xlane.f32.xlu0 %v671
      %v673 = vpop.xlane.xlu0 %672
      %v674 = vsub.f32 %v631, %v670
      %v675 = vsub.f32 %v638, %v673
      %v676 = vmul.f32 %v674, 1.442695
      %v677 = vpow.pop %v676
      %v678 = vmul.f32 %v675, 1.442695
      %v679 = vpow.pop %v678
      %v680 = vsel %vm309, %v677, 0.0
      %681 = vadd.xlane.f32.xlu0 %v680
      %v682 = vpop.xlane.xlu0 %681
      %v683 = vsel %vm309, %v679, 0.0
      %684 = vadd.xlane.f32.xlu0 %v683
      %v685 = vpop.xlane.xlu0 %684
      %v686 = vrcp.pop %v682
      %v687 = vmul.f32 %v677, %v686
      %v688 = vrcp.pop %v685
      %v689 = vmul.f32 %v679, %v688
      %v690 = vsub.f32 1.0, %v687
      %v691 = vsub.f32 1.0, %v689
      %v692 = vld [vmem:[%s2] sm:$0xff]
      %v693 = vld [vmem:[%s2 + $0x8] sm:$0xff]
      %v695 = vsel %vm309, %v692, 0
      %v698 = vsel %vm309, %v693, 0
      %700 = vmatprep.subr.mxu0 0.0
      %701 = vmatpush1.msra.mxu0 %v666
      %702 = vmatprep.subr.mxu0 0.0
      %703 = vmatpush1.msra.mxu0 %v667
      %704 = vmatprep.subr.mxu0 0.0
      %705 = vmatpush1.msra.mxu0 0.0
      %706 = vmatprep.subr.mxu0 0.0
      %707 = vmatpush1.msra.mxu0 0.0
      %708 = vmatprep.subr.mxu0 0.0
      %709 = vmatpush1.msra.mxu0 0.0
      %710 = vmatprep.subr.mxu0 0.0
      %711 = vmatpush1.msra.mxu0 0.0
      %712 = vmatprep.subr.mxu0 0.0
      %713 = vmatpush1.msra.mxu0 0.0
      %714 = vmatprep.subr.mxu0 0.0
      %715 = vmatpush1.msra.mxu0 0.0
      %716 = vmatprep.subr.mxu0 0.0
      %717 = vmatpush1.msra.mxu0 0.0
      %718 = vmatprep.subr.mxu0 0.0
      %719 = vmatpush1.msra.mxu0 0.0
      %720 = vmatprep.subr.mxu0 0.0
      %721 = vmatpush1.msra.mxu0 0.0
      %722 = vmatprep.subr.mxu0 0.0
      %723 = vmatpush1.msra.mxu0 0.0
      %724 = vmatprep.subr.mxu0 0.0
      %725 = vmatpush1.msra.mxu0 0.0
      %726 = vmatprep.subr.mxu0 0.0
      %727 = vmatpush1.msra.mxu0 0.0
      %728 = vmatprep.subr.mxu0 0.0
      %729 = vmatpush1.msra.mxu0 0.0
      %730 = vmatprep.subr.mxu0 0.0
      %731 = vmatpush1.msra.mxu0 0.0
      %732 = vmatprep.subr.mxu0 0.0
      %733 = vmatpush1.msra.mxu0 0.0
      %734 = vmatprep.subr.mxu0 0.0
      %735 = vmatpush1.msra.mxu0 0.0
      %736 = vmatprep.subr.mxu0 0.0
      %737 = vmatpush1.msra.mxu0 0.0
      %738 = vmatprep.subr.mxu0 0.0
      %739 = vmatpush1.msra.mxu0 0.0
      %740 = vmatprep.subr.mxu0 0.0
      %741 = vmatpush1.msra.mxu0 0.0
      %742 = vmatprep.subr.mxu0 0.0
      %743 = vmatpush1.msra.mxu0 0.0
      %744 = vmatprep.subr.mxu0 0.0
      %745 = vmatpush1.msra.mxu0 0.0
      %746 = vmatprep.subr.mxu0 0.0
      %747 = vmatpush1.msra.mxu0 0.0
      %748 = vmatprep.subr.mxu0 0.0
      %749 = vmatpush1.msra.mxu0 0.0
      %750 = vmatprep.subr.mxu0 0.0
      %751 = vmatpush1.msra.mxu0 0.0
      %752 = vmatprep.subr.mxu0 0.0
      %753 = vmatpush1.msra.mxu0 0.0
      %754 = vmatprep.subr.mxu0 0.0
      %755 = vmatpush1.msra.mxu0 0.0
      %756 = vmatprep.subr.mxu0 0.0
      %757 = vmatpush1.msra.mxu0 0.0
      %758 = vmatprep.subr.mxu0 0.0
      %759 = vmatpush1.msra.mxu0 0.0
      %760 = vmatprep.subr.mxu0 0.0
      %761 = vmatpush1.msra.mxu0 0.0
      %762 = vmatprep.subr.mxu0 0.0
      %763 = vmatpush1.msra.mxu0 0.0
      %764 = vmatprep.mubr.f32.mxu0 0.0
      %765 = vmatmul.mubr.f32.gmra.mrb[0].mxu0 %v695
      %v766 = vpop.f32.mrb[0].mxu0
      %v767 = vadd.f32 0.0, %v766
      %v768 = vpop.f32.mrb[0].mxu0
      %769 = vmatprep.mubr.f32.mxu0 0.0
      %770 = vmatmul.mubr.f32.gmra.mrb[0].mxu0 %v698
      %v771 = vpop.f32.mrb[0].mxu0
      %v772 = vadd.f32 0.0, %v771
      %v773 = vpop.f32.mrb[0].mxu0
      %774 = vdwg.mxu0
      %v775 = vmul.f32 %v767, 0.13333334
      %v776 = vmul.f32 %v772, 0.13333334
      %v777 = vsub.f32 %v775, 1.0
      %v778 = vsub.f32 %v776, 1.0
      %v779 = vld [vmem:[%s3] sm:$0xff]
      %v780 = vld [vmem:[%s3 + $0x8] sm:$0xff]
      %v782 = vsel %vm309, %v690, 0
      %v785 = vsel %vm309, %v691, 0
      %787 = vmatprep.subr.mxu0 0.0
      %788 = vmatpush1.msra.mxu0 %v779
      %789 = vmatprep.subr.mxu0 0.0
      %790 = vmatpush1.msra.mxu0 %v780
      %791 = vmatprep.subr.mxu0 0.0
      %792 = vmatpush1.msra.mxu0 0.0
      %793 = vmatprep.subr.mxu0 0.0
      %794 = vmatpush1.msra.mxu0 0.0
      %795 = vmatprep.subr.mxu0 0.0
      %796 = vmatpush1.msra.mxu0 0.0
      %797 = vmatprep.subr.mxu0 0.0
      %798 = vmatpush1.msra.mxu0 0.0
      %799 = vmatprep.subr.mxu0 0.0
      %800 = vmatpush1.msra.mxu0 0.0
      %801 = vmatprep.subr.mxu0 0.0
      %802 = vmatpush1.msra.mxu0 0.0
      %803 = vmatprep.subr.mxu0 0.0
      %804 = vmatpush1.msra.mxu0 0.0
      %805 = vmatprep.subr.mxu0 0.0
      %806 = vmatpush1.msra.mxu0 0.0
      %807 = vmatprep.subr.mxu0 0.0
      %808 = vmatpush1.msra.mxu0 0.0
      %809 = vmatprep.subr.mxu0 0.0
      %810 = vmatpush1.msra.mxu0 0.0
      %811 = vmatprep.subr.mxu0 0.0
      %812 = vmatpush1.msra.mxu0 0.0
      %813 = vmatprep.subr.mxu0 0.0
      %814 = vmatpush1.msra.mxu0 0.0
      %815 = vmatprep.subr.mxu0 0.0
      %816 = vmatpush1.msra.mxu0 0.0
      %817 = vmatprep.subr.mxu0 0.0
      %818 = vmatpush1.msra.mxu0 0.0
      %819 = vmatprep.subr.mxu0 0.0
      %820 = vmatpush1.msra.mxu0 0.0
      %821 = vmatprep.subr.mxu0 0.0
      %822 = vmatpush1.msra.mxu0 0.0
      %823 = vmatprep.subr.mxu0 0.0
      %824 = vmatpush1.msra.mxu0 0.0
      %825 = vmatprep.subr.mxu0 0.0
      %826 = vmatpush1.msra.mxu0 0.0
      %827 = vmatprep.subr.mxu0 0.0
      %828 = vmatpush1.msra.mxu0 0.0
      %829 = vmatprep.subr.mxu0 0.0
      %830 = vmatpush1.msra.mxu0 0.0
      %831 = vmatprep.subr.mxu0 0.0
      %832 = vmatpush1.msra.mxu0 0.0
      %833 = vmatprep.subr.mxu0 0.0
      %834 = vmatpush1.msra.mxu0 0.0
      %835 = vmatprep.subr.mxu0 0.0
      %836 = vmatpush1.msra.mxu0 0.0
      %837 = vmatprep.subr.mxu0 0.0
      %838 = vmatpush1.msra.mxu0 0.0
      %839 = vmatprep.subr.mxu0 0.0
      %840 = vmatpush1.msra.mxu0 0.0
      %841 = vmatprep.subr.mxu0 0.0
      %842 = vmatpush1.msra.mxu0 0.0
      %843 = vmatprep.subr.mxu0 0.0
      %844 = vmatpush1.msra.mxu0 0.0
      %845 = vmatprep.subr.mxu0 0.0
      %846 = vmatpush1.msra.mxu0 0.0
      %847 = vmatprep.subr.mxu0 0.0
      %848 = vmatpush1.msra.mxu0 0.0
      %849 = vmatprep.subr.mxu0 0.0
      %850 = vmatpush1.msra.mxu0 0.0
      %851 = vmatprep.mubr.f32.mxu0 0.0
      %852 = vmatmul.mubr.f32.gmra.mrb[0].mxu0 %v782
      %v853 = vpop.f32.mrb[0].mxu0
      %v854 = vadd.f32 0.0, %v853
      %v855 = vpop.f32.mrb[0].mxu0
      %856 = vmatprep.mubr.f32.mxu0 0.0
      %857 = vmatmul.mubr.f32.gmra.mrb[0].mxu0 %v785
      %v858 = vpop.f32.mrb[0].mxu0
      %v859 = vadd.f32 0.0, %v858
      %v860 = vpop.f32.mrb[0].mxu0
      %861 = vdwg.mxu0
      %v862 = vmul.f32 %v854, 0.13333334
      %v863 = vmul.f32 %v859, 0.13333334
      %v864 = vsub.f32 %v862, 1.0
      %v865 = vsub.f32 %v863, 1.0
      %v866 = vadd.f32 %v777, 1.0
      %v867 = vadd.f32 %v778, 1.0
      %v868 = vmul.f32 %v866, 8.0
      %v869 = vmul.f32 %v867, 8.0
      %v870 = vsub.f32 %v868, 0.5
      %v871 = vsub.f32 %v869, 0.5
      %v872 = vadd.f32 %v864, 1.0
      %v873 = vadd.f32 %v865, 1.0
      %v874 = vmul.f32 %v872, 8.0
      %v875 = vmul.f32 %v873, 8.0
      %v876 = vsub.f32 %v874, 0.5
      %v877 = vsub.f32 %v875, 0.5
      %v879 = vrot.slane %v870, 1
      %880 = vrot.lane.b32.xlu0 %v879, 16
      %v881 = vpop.permute.xlu0 %880
      %v883 = vrot.slane %v870, 2
      %884 = vrot.lane.b32.xlu0 %v883, 32
      %v885 = vpop.permute.xlu0 %884
      %v887 = vrot.slane %v870, 3
      %888 = vrot.lane.b32.xlu0 %v887, 48
      %v889 = vpop.permute.xlu0 %888
      %v891 = vrot.slane %v870, 4
      %892 = vrot.lane.b32.xlu0 %v891, 64
      %v893 = vpop.permute.xlu0 %892
      %v895 = vrot.slane %v870, 5
      %896 = vrot.lane.b32.xlu0 %v895, 80
      %v897 = vpop.permute.xlu0 %896
      %v899 = vrot.slane %v870, 6
      %900 = vrot.lane.b32.xlu0 %v899, 96
      %v901 = vpop.permute.xlu0 %900
      %v903 = vrot.slane %v870, 7
      %904 = vrot.lane.b32.xlu0 %v903, 112
      %v905 = vpop.permute.xlu0 %904
      %v908 = vrot.slane %v871, 1
      %909 = vrot.lane.b32.xlu0 %v908, 16
      %v910 = vpop.permute.xlu0 %909
      %v912 = vrot.slane %v871, 2
      %913 = vrot.lane.b32.xlu0 %v912, 32
      %v914 = vpop.permute.xlu0 %913
      %v916 = vrot.slane %v871, 3
      %917 = vrot.lane.b32.xlu0 %v916, 48
      %v918 = vpop.permute.xlu0 %917
      %v920 = vrot.slane %v871, 4
      %921 = vrot.lane.b32.xlu0 %v920, 64
      %v922 = vpop.permute.xlu0 %921
      %v924 = vrot.slane %v871, 5
      %925 = vrot.lane.b32.xlu0 %v924, 80
      %v926 = vpop.permute.xlu0 %925
      %v928 = vrot.slane %v871, 6
      %929 = vrot.lane.b32.xlu0 %v928, 96
      %v930 = vpop.permute.xlu0 %929
      %v932 = vrot.slane %v871, 7
      %933 = vrot.lane.b32.xlu0 %v932, 112
      %v934 = vpop.permute.xlu0 %933
      %v936 = vsel %vm309, %v870, %v881
      %vm937 = vcmask 261120
      %v938 = vsel %vm937, %v936, %v885
      %vm939 = vcmask 392192
      %v940 = vsel %vm939, %v938, %v889
      %vm941 = vcmask 523264
      %v942 = vsel %vm941, %v940, %v893
      %vm943 = vcmask 654336
      %v944 = vsel %vm943, %v942, %v897
      %vm945 = vcmask 785408
      %v946 = vsel %vm945, %v944, %v901
      %v947 = vsel %vm374, %v946, %v905
      %v948 = vsel %vm309, %v871, %v910
      %v949 = vsel %vm937, %v948, %v914
      %v950 = vsel %vm939, %v949, %v918
      %v951 = vsel %vm941, %v950, %v922
      %v952 = vsel %vm943, %v951, %v926
      %v953 = vsel %vm945, %v952, %v930
      %v954 = vsel %vm374, %v953, %v934
      %v956 = vrot.slane %v876, 1
      %957 = vrot.lane.b32.xlu0 %v956, 16
      %v958 = vpop.permute.xlu0 %957
      %v960 = vrot.slane %v876, 2
      %961 = vrot.lane.b32.xlu0 %v960, 32
      %v962 = vpop.permute.xlu0 %961
      %v964 = vrot.slane %v876, 3
      %965 = vrot.lane.b32.xlu0 %v964, 48
      %v966 = vpop.permute.xlu0 %965
      %v968 = vrot.slane %v876, 4
      %969 = vrot.lane.b32.xlu0 %v968, 64
      %v970 = vpop.permute.xlu0 %969
      %v972 = vrot.slane %v876, 5
      %973 = vrot.lane.b32.xlu0 %v972, 80
      %v974 = vpop.permute.xlu0 %973
      %v976 = vrot.slane %v876, 6
      %977 = vrot.lane.b32.xlu0 %v976, 96
      %v978 = vpop.permute.xlu0 %977
      %v980 = vrot.slane %v876, 7
      %981 = vrot.lane.b32.xlu0 %v980, 112
      %v982 = vpop.permute.xlu0 %981
      %v985 = vrot.slane %v877, 1
      %986 = vrot.lane.b32.xlu0 %v985, 16
      %v987 = vpop.permute.xlu0 %986
      %v989 = vrot.slane %v877, 2
      %990 = vrot.lane.b32.xlu0 %v989, 32
      %v991 = vpop.permute.xlu0 %990
      %v993 = vrot.slane %v877, 3
      %994 = vrot.lane.b32.xlu0 %v993, 48
      %v995 = vpop.permute.xlu0 %994
      %v997 = vrot.slane %v877, 4
      %998 = vrot.lane.b32.xlu0 %v997, 64
      %v999 = vpop.permute.xlu0 %998
      %v1001 = vrot.slane %v877, 5
      %1002 = vrot.lane.b32.xlu0 %v1001, 80
      %v1003 = vpop.permute.xlu0 %1002
      %v1005 = vrot.slane %v877, 6
      %1006 = vrot.lane.b32.xlu0 %v1005, 96
      %v1007 = vpop.permute.xlu0 %1006
      %v1009 = vrot.slane %v877, 7
      %1010 = vrot.lane.b32.xlu0 %v1009, 112
      %v1011 = vpop.permute.xlu0 %1010
      %v1013 = vsel %vm309, %v876, %v958
      %v1014 = vsel %vm937, %v1013, %v962
      %v1015 = vsel %vm939, %v1014, %v966
      %v1016 = vsel %vm941, %v1015, %v970
      %v1017 = vsel %vm943, %v1016, %v974
      %v1018 = vsel %vm945, %v1017, %v978
      %v1019 = vsel %vm374, %v1018, %v982
      %v1020 = vsel %vm309, %v877, %v987
      %v1021 = vsel %vm937, %v1020, %v991
      %v1022 = vsel %vm939, %v1021, %v995
      %v1023 = vsel %vm941, %v1022, %v999
      %v1024 = vsel %vm943, %v1023, %v1003
      %v1025 = vsel %vm945, %v1024, %v1007
      %v1026 = vsel %vm374, %v1025, %v1011
      %v1027 = vld [vmem:[%s4] sm:$0xff]
      %v1028 = vld [vmem:[%s4 + $0x8] sm:$0xff]
      %v1029 = vld [vmem:[%s4 + $0x10] sm:$0xff]
      %v1030 = vld [vmem:[%s4 + $0x18] sm:$0xff]
      %v1031 = vlaneseq
      %v1032 = vshrl.u32 %v1031, 7
      %v1033 = vsub.s32 0, %v1032
      %v1034 = vrot.slane %v947, %v1033
      %v1035 = vlaneseq
      %v1036 = vshrl.u32 %v1035, 7
      %v1037 = vsub.s32 0, %v1036
      %v1038 = vrot.slane %v954, %v1037
      %v1039 = vsub.f32 %v1027, %v1034
      %v1040 = vsub.f32 %v1028, %v1038
      %v1041 = vsub.f32 %v1029, %v1034
      %v1042 = vsub.f32 %v1030, %v1038
      %v1043 = vand.u32 2147483647, %v1039
      %v1044 = vand.u32 2147483647, %v1040
      %v1045 = vand.u32 2147483647, %v1041
      %v1046 = vand.u32 2147483647, %v1042
      %v1047 = vsub.f32 1.0, %v1043
      %v1048 = vsub.f32 1.0, %v1044
      %v1049 = vsub.f32 1.0, %v1045
      %v1050 = vsub.f32 1.0, %v1046
      %v1051 = vmax.f32 %v1047, 0.0
      %v1052 = vmax.f32 %v1048, 0.0
      %v1053 = vmax.f32 %v1049, 0.0
      %v1054 = vmax.f32 %v1050, 0.0
      %v1055 = vld [vmem:[%s5] sm:$0xff]
      %v1056 = vld [vmem:[%s5 + $0x8] sm:$0xff]
      %v1057 = vld [vmem:[%s5 + $0x10] sm:$0xff]
      %v1058 = vld [vmem:[%s5 + $0x18] sm:$0xff]
      %v1059 = vlaneseq
      %v1060 = vshrl.u32 %v1059, 7
      %v1061 = vsub.s32 0, %v1060
      %v1062 = vrot.slane %v1019, %v1061
      %v1063 = vlaneseq
      %v1064 = vshrl.u32 %v1063, 7
      %v1065 = vsub.s32 0, %v1064
      %v1066 = vrot.slane %v1026, %v1065
      %v1067 = vsub.f32 %v1055, %v1062
      %v1068 = vsub.f32 %v1056, %v1066
      %v1069 = vsub.f32 %v1057, %v1062
      %v1070 = vsub.f32 %v1058, %v1066
      %v1071 = vand.u32 2147483647, %v1067
      %v1072 = vand.u32 2147483647, %v1068
      %v1073 = vand.u32 2147483647, %v1069
      %v1074 = vand.u32 2147483647, %v1070
      %v1075 = vsub.f32 1.0, %v1071
      %v1076 = vsub.f32 1.0, %v1072
      %v1077 = vsub.f32 1.0, %v1073
      %v1078 = vsub.f32 1.0, %v1074
      %v1079 = vmax.f32 %v1075, 0.0
      %v1080 = vmax.f32 %v1076, 0.0
      %v1081 = vmax.f32 %v1077, 0.0
      %v1082 = vmax.f32 %v1078, 0.0
      %v1087 = vcombine.low %v1079, %v1080
      %v1088 = vcombine.high %v1079, %v1080
      %v1090 = vunpack.c.l.s4 1966171168
      %v1091 = vunpack.c.0.s8 %v1090
      %v1092 = vlaneseq
      %v1093 = vshrl.u32 %v1092, 7
      %v1094 = vsub.s32 %v1091, %v1093
      %v1095 = vrot.slane %v1087, %v1094
      %v1097 = vunpack.c.l.s4 1966171168
      %v1098 = vunpack.c.0.s8 %v1097
      %v1099 = vlaneseq
      %v1100 = vshrl.u32 %v1099, 7
      %v1101 = vsub.s32 %v1098, %v1100
      %v1102 = vrot.slane %v1088, %v1101
      %v1103 = vcombine.high %v1095, %v1095
      %v1104 = vcombine.high %v1102, %v1102
      %v1106 = vunpack.c.l.s4 1966171168
      %v1107 = vunpack.c.0.s8 %v1106
      %v1108 = vlaneseq
      %v1109 = vshrl.u32 %v1108, 7
      %v1110 = vsub.s32 %v1107, %v1109
      %v1111 = vrot.slane %v1095, %v1110
      %v1113 = vunpack.c.l.s4 1966171168
      %v1114 = vunpack.c.0.s8 %v1113
      %v1115 = vlaneseq
      %v1116 = vshrl.u32 %v1115, 7
      %v1117 = vsub.s32 %v1114, %v1116
      %v1118 = vrot.slane %v1102, %v1117
      %v1120 = vunpack.c.l.s4 1966171168
      %v1121 = vunpack.c.0.s8 %v1120
      %v1122 = vlaneseq
      %v1123 = vshrl.u32 %v1122, 7
      %v1124 = vsub.s32 %v1121, %v1123
      %v1125 = vrot.slane %v1103, %v1124
      %v1127 = vunpack.c.l.s4 1966171168
      %v1128 = vunpack.c.0.s8 %v1127
      %v1129 = vlaneseq
      %v1130 = vshrl.u32 %v1129, 7
      %v1131 = vsub.s32 %v1128, %v1130
      %v1132 = vrot.slane %v1104, %v1131
      %v1133 = vcombine.high %v1111, %v1111
      %v1134 = vcombine.high %v1118, %v1118
      %v1135 = vcombine.high %v1125, %v1125
      %v1136 = vcombine.high %v1132, %v1132
      %v1137 = vcombine.low %v1081, %v1082
      %v1138 = vcombine.high %v1081, %v1082
      %v1140 = vunpack.c.l.s4 1966171168
      %v1141 = vunpack.c.0.s8 %v1140
      %v1142 = vlaneseq
      %v1143 = vshrl.u32 %v1142, 7
      %v1144 = vsub.s32 %v1141, %v1143
      %v1145 = vrot.slane %v1137, %v1144
      %v1147 = vunpack.c.l.s4 1966171168
      %v1148 = vunpack.c.0.s8 %v1147
      %v1149 = vlaneseq
      %v1150 = vshrl.u32 %v1149, 7
      %v1151 = vsub.s32 %v1148, %v1150
      %v1152 = vrot.slane %v1138, %v1151
      %v1153 = vcombine.high %v1145, %v1145
      %v1154 = vcombine.high %v1152, %v1152
      %v1156 = vunpack.c.l.s4 1966171168
      %v1157 = vunpack.c.0.s8 %v1156
      %v1158 = vlaneseq
      %v1159 = vshrl.u32 %v1158, 7
      %v1160 = vsub.s32 %v1157, %v1159
      %v1161 = vrot.slane %v1145, %v1160
      %v1163 = vunpack.c.l.s4 1966171168
      %v1164 = vunpack.c.0.s8 %v1163
      %v1165 = vlaneseq
      %v1166 = vshrl.u32 %v1165, 7
      %v1167 = vsub.s32 %v1164, %v1166
      %v1168 = vrot.slane %v1152, %v1167
      %v1170 = vunpack.c.l.s4 1966171168
      %v1171 = vunpack.c.0.s8 %v1170
      %v1172 = vlaneseq
      %v1173 = vshrl.u32 %v1172, 7
      %v1174 = vsub.s32 %v1171, %v1173
      %v1175 = vrot.slane %v1153, %v1174
      %v1177 = vunpack.c.l.s4 1966171168
      %v1178 = vunpack.c.0.s8 %v1177
      %v1179 = vlaneseq
      %v1180 = vshrl.u32 %v1179, 7
      %v1181 = vsub.s32 %v1178, %v1180
      %v1182 = vrot.slane %v1154, %v1181
      %v1183 = vcombine.high %v1161, %v1161
      %v1184 = vcombine.high %v1168, %v1168
      %v1185 = vcombine.high %v1175, %v1175
      %v1186 = vcombine.high %v1182, %v1182
      %v1187 = vlaneseq
      %v1188 = vshrl.u32 %v1187, 7
      %v1189 = vsub.s32 0, %v1188
      %v1190 = vrot.slane %v1111, %v1189
      %v1191 = vlaneseq
      %v1192 = vshrl.u32 %v1191, 7
      %v1193 = vsub.s32 1, %v1192
      %v1194 = vrot.slane %v1111, %v1193
      %v1195 = vlaneseq
      %v1196 = vshrl.u32 %v1195, 7
      %v1197 = vsub.s32 0, %v1196
      %v1198 = vrot.slane %v1125, %v1197
      %v1199 = vlaneseq
      %v1200 = vshrl.u32 %v1199, 7
      %v1201 = vsub.s32 1, %v1200
      %v1202 = vrot.slane %v1125, %v1201
      %v1203 = vlaneseq
      %v1204 = vshrl.u32 %v1203, 7
      %v1205 = vsub.s32 0, %v1204
      %v1206 = vrot.slane %v1133, %v1205
      %v1207 = vlaneseq
      %v1208 = vshrl.u32 %v1207, 7
      %v1209 = vsub.s32 1, %v1208
      %v1210 = vrot.slane %v1133, %v1209
      %v1211 = vlaneseq
      %v1212 = vshrl.u32 %v1211, 7
      %v1213 = vsub.s32 0, %v1212
      %v1214 = vrot.slane %v1135, %v1213
      %v1215 = vlaneseq
      %v1216 = vshrl.u32 %v1215, 7
      %v1217 = vsub.s32 1, %v1216
      %v1218 = vrot.slane %v1135, %v1217
      %v1219 = vlaneseq
      %v1220 = vshrl.u32 %v1219, 7
      %v1221 = vsub.s32 0, %v1220
      %v1222 = vrot.slane %v1118, %v1221
      %v1223 = vlaneseq
      %v1224 = vshrl.u32 %v1223, 7
      %v1225 = vsub.s32 1, %v1224
      %v1226 = vrot.slane %v1118, %v1225
      %v1227 = vlaneseq
      %v1228 = vshrl.u32 %v1227, 7
      %v1229 = vsub.s32 0, %v1228
      %v1230 = vrot.slane %v1132, %v1229
      %v1231 = vlaneseq
      %v1232 = vshrl.u32 %v1231, 7
      %v1233 = vsub.s32 1, %v1232
      %v1234 = vrot.slane %v1132, %v1233
      %v1235 = vlaneseq
      %v1236 = vshrl.u32 %v1235, 7
      %v1237 = vsub.s32 0, %v1236
      %v1238 = vrot.slane %v1134, %v1237
      %v1239 = vlaneseq
      %v1240 = vshrl.u32 %v1239, 7
      %v1241 = vsub.s32 1, %v1240
      %v1242 = vrot.slane %v1134, %v1241
      %v1243 = vlaneseq
      %v1244 = vshrl.u32 %v1243, 7
      %v1245 = vsub.s32 0, %v1244
      %v1246 = vrot.slane %v1136, %v1245
      %v1247 = vlaneseq
      %v1248 = vshrl.u32 %v1247, 7
      %v1249 = vsub.s32 1, %v1248
      %v1250 = vrot.slane %v1136, %v1249
      %v1251 = vlaneseq
      %v1252 = vshrl.u32 %v1251, 7
      %v1253 = vsub.s32 0, %v1252
      %v1254 = vrot.slane %v1161, %v1253
      %v1255 = vlaneseq
      %v1256 = vshrl.u32 %v1255, 7
      %v1257 = vsub.s32 1, %v1256
      %v1258 = vrot.slane %v1161, %v1257
      %v1259 = vlaneseq
      %v1260 = vshrl.u32 %v1259, 7
      %v1261 = vsub.s32 0, %v1260
      %v1262 = vrot.slane %v1175, %v1261
      %v1263 = vlaneseq
      %v1264 = vshrl.u32 %v1263, 7
      %v1265 = vsub.s32 1, %v1264
      %v1266 = vrot.slane %v1175, %v1265
      %v1267 = vlaneseq
      %v1268 = vshrl.u32 %v1267, 7
      %v1269 = vsub.s32 0, %v1268
      %v1270 = vrot.slane %v1183, %v1269
      %v1271 = vlaneseq
      %v1272 = vshrl.u32 %v1271, 7
      %v1273 = vsub.s32 1, %v1272
      %v1274 = vrot.slane %v1183, %v1273
      %v1275 = vlaneseq
      %v1276 = vshrl.u32 %v1275, 7
      %v1277 = vsub.s32 0, %v1276
      %v1278 = vrot.slane %v1185, %v1277
      %v1279 = vlaneseq
      %v1280 = vshrl.u32 %v1279, 7
      %v1281 = vsub.s32 1, %v1280
      %v1282 = vrot.slane %v1185, %v1281
      %v1283 = vlaneseq
      %v1284 = vshrl.u32 %v1283, 7
      %v1285 = vsub.s32 0, %v1284
      %v1286 = vrot.slane %v1168, %v1285
      %v1287 = vlaneseq
      %v1288 = vshrl.u32 %v1287, 7
      %v1289 = vsub.s32 1, %v1288
      %v1290 = vrot.slane %v1168, %v1289
      %v1291 = vlaneseq
      %v1292 = vshrl.u32 %v1291, 7
      %v1293 = vsub.s32 0, %v1292
      %v1294 = vrot.slane %v1182, %v1293
      %v1295 = vlaneseq
      %v1296 = vshrl.u32 %v1295, 7
      %v1297 = vsub.s32 1, %v1296
      %v1298 = vrot.slane %v1182, %v1297
      %v1299 = vlaneseq
      %v1300 = vshrl.u32 %v1299, 7
      %v1301 = vsub.s32 0, %v1300
      %v1302 = vrot.slane %v1184, %v1301
      %v1303 = vlaneseq
      %v1304 = vshrl.u32 %v1303, 7
      %v1305 = vsub.s32 1, %v1304
      %v1306 = vrot.slane %v1184, %v1305
      %v1307 = vlaneseq
      %v1308 = vshrl.u32 %v1307, 7
      %v1309 = vsub.s32 0, %v1308
      %v1310 = vrot.slane %v1186, %v1309
      %v1311 = vlaneseq
      %v1312 = vshrl.u32 %v1311, 7
      %v1313 = vsub.s32 1, %v1312
      %v1314 = vrot.slane %v1186, %v1313
      %v1347 = vmul.f32 %v1190, %v1051
      %v1348 = vmul.f32 %v1194, %v1052
      %v1349 = vmul.f32 %v1190, %v1053
      %v1350 = vmul.f32 %v1194, %v1054
      %v1351 = vmul.f32 %v1198, %v1051
      %v1352 = vmul.f32 %v1202, %v1052
      %v1353 = vmul.f32 %v1198, %v1053
      %v1354 = vmul.f32 %v1202, %v1054
      %v1355 = vmul.f32 %v1206, %v1051
      %v1356 = vmul.f32 %v1210, %v1052
      %v1357 = vmul.f32 %v1206, %v1053
      %v1358 = vmul.f32 %v1210, %v1054
      %v1359 = vmul.f32 %v1214, %v1051
      %v1360 = vmul.f32 %v1218, %v1052
      %v1361 = vmul.f32 %v1214, %v1053
      %v1362 = vmul.f32 %v1218, %v1054
      %v1363 = vmul.f32 %v1222, %v1051
      %v1364 = vmul.f32 %v1226, %v1052
      %v1365 = vmul.f32 %v1222, %v1053
      %v1366 = vmul.f32 %v1226, %v1054
      %v1367 = vmul.f32 %v1230, %v1051
      %v1368 = vmul.f32 %v1234, %v1052
      %v1369 = vmul.f32 %v1230, %v1053
      %v1370 = vmul.f32 %v1234, %v1054
      %v1371 = vmul.f32 %v1238, %v1051
      %v1372 = vmul.f32 %v1242, %v1052
      %v1373 = vmul.f32 %v1238, %v1053
      %v1374 = vmul.f32 %v1242, %v1054
      %v1375 = vmul.f32 %v1246, %v1051
      %v1376 = vmul.f32 %v1250, %v1052
      %v1377 = vmul.f32 %v1246, %v1053
      %v1378 = vmul.f32 %v1250, %v1054
      %v1379 = vmul.f32 %v1254, %v1051
      %v1380 = vmul.f32 %v1258, %v1052
      %v1381 = vmul.f32 %v1254, %v1053
      %v1382 = vmul.f32 %v1258, %v1054
      %v1383 = vmul.f32 %v1262, %v1051
      %v1384 = vmul.f32 %v1266, %v1052
      %v1385 = vmul.f32 %v1262, %v1053
      %v1386 = vmul.f32 %v1266, %v1054
      %v1387 = vmul.f32 %v1270, %v1051
      %v1388 = vmul.f32 %v1274, %v1052
      %v1389 = vmul.f32 %v1270, %v1053
      %v1390 = vmul.f32 %v1274, %v1054
      %v1391 = vmul.f32 %v1278, %v1051
      %v1392 = vmul.f32 %v1282, %v1052
      %v1393 = vmul.f32 %v1278, %v1053
      %v1394 = vmul.f32 %v1282, %v1054
      %v1395 = vmul.f32 %v1286, %v1051
      %v1396 = vmul.f32 %v1290, %v1052
      %v1397 = vmul.f32 %v1286, %v1053
      %v1398 = vmul.f32 %v1290, %v1054
      %v1399 = vmul.f32 %v1294, %v1051
      %v1400 = vmul.f32 %v1298, %v1052
      %v1401 = vmul.f32 %v1294, %v1053
      %v1402 = vmul.f32 %v1298, %v1054
      %v1403 = vmul.f32 %v1302, %v1051
      %v1404 = vmul.f32 %v1306, %v1052
      %v1405 = vmul.f32 %v1302, %v1053
      %v1406 = vmul.f32 %v1306, %v1054
      %v1407 = vmul.f32 %v1310, %v1051
      %v1408 = vmul.f32 %v1314, %v1052
      %v1409 = vmul.f32 %v1310, %v1053
      %v1410 = vmul.f32 %v1314, %v1054
      %1411 = vmatprep.subr.mxu0 %v1348
      %1412 = vmatpush1.msra.mxu0 %v1347
      %1413 = vmatprep.subr.mxu0 %v1350
      %1414 = vmatpush1.msra.mxu0 %v1349
      %1415 = vmatprep.subr.mxu0 %v1352
      %1416 = vmatpush1.msra.mxu0 %v1351
      %1417 = vmatprep.subr.mxu0 %v1354
      %1418 = vmatpush1.msra.mxu0 %v1353
      %1419 = vmatprep.subr.mxu0 %v1356
      %1420 = vmatpush1.msra.mxu0 %v1355
      %1421 = vmatprep.subr.mxu0 %v1358
      %1422 = vmatpush1.msra.mxu0 %v1357
      %1423 = vmatprep.subr.mxu0 %v1360
      %1424 = vmatpush1.msra.mxu0 %v1359
      %1425 = vmatprep.subr.mxu0 %v1362
      %1426 = vmatpush1.msra.mxu0 %v1361
      %1427 = vmatprep.subr.mxu0 %v1364
      %1428 = vmatpush1.msra.mxu0 %v1363
      %1429 = vmatprep.subr.mxu0 %v1366
      %1430 = vmatpush1.msra.mxu0 %v1365
      %1431 = vmatprep.subr.mxu0 %v1368
      %1432 = vmatpush1.msra.mxu0 %v1367
      %1433 = vmatprep.subr.mxu0 %v1370
      %1434 = vmatpush1.msra.mxu0 %v1369
      %1435 = vmatprep.subr.mxu0 %v1372
      %1436 = vmatpush1.msra.mxu0 %v1371
      %1437 = vmatprep.subr.mxu0 %v1374
      %1438 = vmatpush1.msra.mxu0 %v1373
      %1439 = vmatprep.subr.mxu0 %v1376
      %1440 = vmatpush1.msra.mxu0 %v1375
      %1441 = vmatprep.subr.mxu0 %v1378
      %1442 = vmatpush1.msra.mxu0 %v1377
      %1443 = vmatprep.subr.mxu0 %v1380
      %1444 = vmatpush1.msra.mxu0 %v1379
      %1445 = vmatprep.subr.mxu0 %v1382
      %1446 = vmatpush1.msra.mxu0 %v1381
      %1447 = vmatprep.subr.mxu0 %v1384
      %1448 = vmatpush1.msra.mxu0 %v1383
      %1449 = vmatprep.subr.mxu0 %v1386
      %1450 = vmatpush1.msra.mxu0 %v1385
      %1451 = vmatprep.subr.mxu0 %v1388
      %1452 = vmatpush1.msra.mxu0 %v1387
      %1453 = vmatprep.subr.mxu0 %v1390
      %1454 = vmatpush1.msra.mxu0 %v1389
      %1455 = vmatprep.subr.mxu0 %v1392
      %1456 = vmatpush1.msra.mxu0 %v1391
      %1457 = vmatprep.subr.mxu0 %v1394
      %1458 = vmatpush1.msra.mxu0 %v1393
      %1459 = vmatprep.subr.mxu0 %v1396
      %1460 = vmatpush1.msra.mxu0 %v1395
      %1461 = vmatprep.subr.mxu0 %v1398
      %1462 = vmatpush1.msra.mxu0 %v1397
      %1463 = vmatprep.subr.mxu0 %v1400
      %1464 = vmatpush1.msra.mxu0 %v1399
      %1465 = vmatprep.subr.mxu0 %v1402
      %1466 = vmatpush1.msra.mxu0 %v1401
      %1467 = vmatprep.subr.mxu0 %v1404
      %1468 = vmatpush1.msra.mxu0 %v1403
      %1469 = vmatprep.subr.mxu0 %v1406
      %1470 = vmatpush1.msra.mxu0 %v1405
      %1471 = vmatprep.subr.mxu0 %v1408
      %1472 = vmatpush1.msra.mxu0 %v1407
      %1473 = vmatprep.subr.mxu0 %v1410
      %1474 = vmatpush1.msra.mxu0 %v1409
      %1475 = vmatprep.mubr.f32.mxu0 %v281
      %1476 = vmatmul.mubr.f32.gmra.mrb[0].mxu0 %v279
      %v1477 = vpop.f32.mrb[0].mxu0
      %v1478 = vadd.f32 0.0, %v1477
      %v1479 = vpop.f32.mrb[0].mxu0
      %v1480 = vadd.f32 0.0, %v1479
      %1481 = vdwg.mxu0
      %v1484 = vcombine.low %v1478, %v1480
      %1486 = vst [vmem:[%s278] sm:$0xff] %v1484
      %p1487 = scmp.lt.s32.totalorder %s18, 1
      %s1488 = scalar_select %p1487, %s18, 1
      %s1489 = smul.addr %s1488, 2
      %s1490 = smul.addr %s1489, 4
      %s1491 = scalar_lea.vmem %s7, %s1490
      // Predicated region
      $region49: #{_resample_layer_impl.1} parent=47 // pred_check
        %p1492 = pneg %p188
      $region50: #{_resample_layer_impl.1} parent=47 // pred_check_branch
        %1494 = sbr.rel (%p1492) target = $region52
      $region51: #{_resample_layer_impl.1} parent=47 // pred_region
        _
      $region52: #{_resample_layer_impl.1} parent=47 // pred_fallthru
        _
    $region48: #{_resample_layer_impl.1} parent=5 // pred_fallthru
      _
    %p1495 = scmp.le.s32.totalorder 2, %s13
    // Predicated region
    $region53: #{_resample_layer_impl.1} parent=5 // pred_check
      %p1496 = pneg %p1495
    $region54: #{_resample_layer_impl.1} parent=5 // pred_check_branch
      %1498 = sbr.rel (%p1496) target = $region56
    $region55: #{_resample_layer_impl.1} parent=5 // pred_region
      %s1499 = ssub.s32 %s13, 2
      // Predicated region
      $region57: #{_resample_layer_impl.1} parent=55 // pred_check
        %p1500 = pneg %p194
      $region58: #{_resample_layer_impl.1} parent=55 // pred_check_branch
        %1502 = sbr.rel (%p1500) target = $region60
      $region59: #{_resample_layer_impl.1} parent=55 // pred_region
        %p1503 = scmp.lt.s32.totalorder %s19, 1
        %s1504 = scalar_select %p1503, %s19, 1
        %s1505 = smul.addr %s1504, 2
        %s1506 = smul.addr %s1505, 4
        %s1507 = scalar_lea.vmem %s7, %s1506
      $region60: #{_resample_layer_impl.1} parent=55 // pred_fallthru
        _
    $region56: #{_resample_layer_impl.1} parent=5 // pred_fallthru
      _
  $region6: #{_resample_layer_impl.1} parent=0 // loop_footer
    %s17 = sadd.s32 1, %s13
  $region7: #{_resample_layer_impl.1} parent=0 // loop_footer_branch
    %12 = sbr.rel target = $region3
  $region8: #{_resample_layer_impl.1} parent=0 // loop_exit
    _

</llo_original>
